<compile_context>
chip_gen: v7x
topology: tpu7x:2x2x1
jax: 0.10.0
libtpu: 0.0.40
codegen_flags: <defaults>
</compile_context>

<pallas_src>
import functools

import jax
import jax.numpy as jnp
from jax.experimental import pallas as pl
from jax.experimental.pallas import tpu as pltpu


# ---------------------------------------------------------------------------
# Fused MHA kernel: one grid step = the whole batch.
# ---------------------------------------------------------------------------
def _mha_kernel(x_ref, wqkv_ref, bqkv_ref, wc_ref, bc_ref, bias_ref, seg_ref,
                o_ref, *, num_heads, head_dim):
    H, D = num_heads, head_dim
    HD = H * D
    BT = x_ref.shape[0]                     # all batches' tokens, merged

    # ---- fused Q/K/V projection: one MXU matmul, bf16 operands, f32 acc ----
    x = x_ref[...].astype(jnp.bfloat16)                      # (BT, D)
    qkv = jnp.dot(x, wqkv_ref[...],
                  preferred_element_type=jnp.float32) + bqkv_ref[...]
    # D**-0.5 score scale is already folded into Wq / bq (prepare_params).
    q = qkv[:, 0:HD].astype(jnp.bfloat16)
    k = qkv[:, HD:2 * HD].astype(jnp.bfloat16)
    v = qkv[:, 2 * HD:3 * HD].astype(jnp.bfloat16)

    # ---- scores for all heads, packed lane-dense: (BT, H*BT) ---------------
    s_list = []
    for h in range(H):                                       # H static & small
        lo = h * D
        s_list.append(jax.lax.dot_general(
            q[:, lo:lo + D], k[:, lo:lo + D],
            (((1,), (1,)), ((), ())),                        # q_h @ k_h^T
            preferred_element_type=jnp.float32))             # (BT, BT)
    # bias carries both the block-diagonal batch mask and the causal mask
    # (finite -1e30, not -inf, so a fully-masked row can never produce NaN).
    s = jnp.concatenate(s_list, axis=-1) + bias_ref[...]     # (BT, H*BT)

    # ---- softmax batched across all heads at once ---------------------------
    # A single per-row max over all heads is a valid stabilizer (softmax is
    # invariant to any per-row constant); per-head denominators come from one
    # MXU matmul against a block-diagonal ones matrix (segmented row sums).
    m = jnp.max(s, axis=-1, keepdims=True)                   # (BT, 1)
    e = jnp.exp(s - m)                                       # 2 dense vregs
    denom = jnp.dot(e, seg_ref[...],
                    preferred_element_type=jnp.float32)      # (BT, H*BT)
    p = (e * pl.reciprocal(denom, approx=True)).astype(jnp.bfloat16)

    # ---- per-head PV, gathered into one (BT, H*D) slab ----------------------
    sa_list = []
    for h in range(H):
        sa_list.append(jnp.dot(p[:, h * BT:(h + 1) * BT],
                               v[:, h * D:(h + 1) * D],
                               preferred_element_type=jnp.float32))  # (BT, D)
    sa = jnp.concatenate(sa_list, axis=-1).astype(jnp.bfloat16)      # (BT, HD)

    # ---- single output projection (K = H*D = 256 fills the MXU) -------------
    o_ref[...] = jnp.dot(sa, wc_ref[...],
                         preferred_element_type=jnp.float32) + bc_ref[...]


# ---------------------------------------------------------------------------
# One-time parameter prep (hoisted out of the jitted forward)
# ---------------------------------------------------------------------------
def prepare_params(params):
    """Concat [Wq|Wk|Wv], fold the D**-0.5 score scale into the Q projection,
    cast MXU weight operands to bf16 (accumulation stays f32 in-kernel)."""
    D = params["wq"].shape[0]
    scale = jnp.float32(float(D) ** -0.5)
    wqkv = jnp.concatenate(
        [params["wq"] * scale, params["wk"], params["wv"]], axis=1)
    bqkv = jnp.concatenate(
        [params["bq"] * scale, params["bk"], params["bv"]], axis=1)
    return dict(wqkv=wqkv.astype(jnp.bfloat16),
                bqkv=bqkv.astype(jnp.float32),
                wc=params["wc"].astype(jnp.bfloat16),
                bc=params["bc"].astype(jnp.float32))


# ---------------------------------------------------------------------------
# Python wrapper
# ---------------------------------------------------------------------------
@functools.partial(jax.jit, static_argnames=("num_heads", "causal"))
def multi_head_self_attention(x, prep, *, num_heads, causal=True):
    B, T, D = x.shape
    H = num_heads
    HD = H * D
    BT = B * T

    x2 = x.reshape(BT, D)        # contiguous reshape, free in XLA

    # Attention bias (constant-folded by XLA: depends only on static shapes).
    # Cross-batch attention is always masked (batch collapsed into one step);
    # causal adds the upper-triangular part.
    r = jax.lax.broadcasted_iota(jnp.int32, (BT, BT), 0)
    c = jax.lax.broadcasted_iota(jnp.int32, (BT, BT), 1)
    blocked = (r // T) != (c // T)
    if causal:
        blocked = blocked | ((c % T) > (r % T))
    bias = jnp.where(blocked, jnp.float32(-1e30), jnp.float32(0.0))
    bias = jnp.tile(bias, (1, H))                               # (BT, H*BT)

    # Block-diagonal ones for the segmented softmax-denominator matmul.
    sr = jax.lax.broadcasted_iota(jnp.int32, (H * BT, H * BT), 0)
    sc = jax.lax.broadcasted_iota(jnp.int32, (H * BT, H * BT), 1)
    seg = ((sr // BT) == (sc // BT)).astype(jnp.float32)        # (H*BT, H*BT)

    flops = int(2 * BT * D * 3 * HD            # QKV projection
                + 2 * H * BT * BT * D          # Q @ K^T
                + 2 * BT * (H * BT) ** 2       # segmented denominator matmul
                + 2 * H * BT * BT * D          # P @ V
                + 2 * BT * HD * D)             # output projection
    transcendentals = int(2 * BT * H * BT)     # exp + reciprocal
    bytes_accessed = int(x2.size * x2.dtype.itemsize
                         + sum(int(v.size) * v.dtype.itemsize
                               for v in prep.values())
                         + bias.size * 4 + seg.size * 4 + BT * D * 4)

    out = pl.pallas_call(
        functools.partial(_mha_kernel, num_heads=H, head_dim=D),
        out_shape=jax.ShapeDtypeStruct((BT, D), jnp.float32),
        grid=(1,),
        in_specs=[
            pl.BlockSpec((BT, D), lambda i: (0, 0)),            # x  (tokens)
            pl.BlockSpec((D, 3 * HD), lambda i: (0, 0)),        # [Wq|Wk|Wv]
            pl.BlockSpec((1, 3 * HD), lambda i: (0, 0)),        # [bq|bk|bv]
            pl.BlockSpec((HD, D), lambda i: (0, 0)),            # Wc
            pl.BlockSpec((1, D), lambda i: (0, 0)),             # bc
            pl.BlockSpec((BT, H * BT), lambda i: (0, 0)),       # attn bias
            pl.BlockSpec((H * BT, H * BT), lambda i: (0, 0)),   # segment ones
        ],
        out_specs=pl.BlockSpec((BT, D), lambda i: (0, 0)),
        compiler_params=pltpu.CompilerParams(
            dimension_semantics=("arbitrary",)),
        cost_estimate=pl.CostEstimate(flops=flops,
                                      transcendentals=transcendentals,
                                      bytes_accessed=bytes_accessed),
    )(x2, prep["wqkv"], prep["bqkv"], prep["wc"], prep["bc"], bias, seg)

    return out.reshape(B, T, D)


# ---------------------------------------------------------------------------
# Pure-JAX reference (mirrors the PyTorch forward exactly)
# ---------------------------------------------------------------------------
def reference(x, params, *, num_heads, causal=True):
    B, T, D = x.shape
    H = num_heads
    scale = float(D) ** -0.25
    k = (x @ params["wk"] + params["bk"]).reshape(B, T, H, D).transpose(0, 2, 1, 3)
    q = (x @ params["wq"] + params["bq"]).reshape(B, T, H, D).transpose(0, 2, 1, 3)
    v = (x @ params["wv"] + params["bv"]).reshape(B, T, H, D).transpose(0, 2, 1, 3)
    scores = jnp.einsum("bhtd,bhsd->bhts", q * scale, k * scale)
    if causal:
        mask = jnp.triu(jnp.ones((T, T), dtype=bool), k=1)
        scores = jnp.where(mask, -jnp.inf, scores)
    p = jax.nn.softmax(scores, axis=-1)
    sa = jnp.einsum("bhts,bhsd->bhtd", p, v)
    sa = sa.transpose(0, 2, 1, 3).reshape(B, T, H * D)
    return sa @ params["wc"] + params["bc"]


def init_params(key, D, H):
    """Deterministic nn.Linear-style init. Weights stored as (in, out)."""
    HD = D * H
    ks = jax.random.split(key, 8)

    def lin(kw, kb, fan_in, fan_out):
        bound = 1.0 / (fan_in ** 0.5)
        w = jax.random.uniform(kw, (fan_in, fan_out), jnp.float32, -bound, bound)
        b = jax.random.uniform(kb, (1, fan_out), jnp.float32, -bound, bound)
        return w, b

    wk, bk = lin(ks[0], ks[1], D, HD)
    wq, bq = lin(ks[2], ks[3], D, HD)
    wv, bv = lin(ks[4], ks[5], D, HD)
    wc, bc = lin(ks[6], ks[7], HD, D)
    return dict(wq=wq, bq=bq, wk=wk, bk=bk, wv=wv, bv=bv, wc=wc, bc=bc)


if __name__ == "__main__":
    B, T, D, H = 2, 8, 32, 8          # batch, seq, num_emb, num_heads

    root = jax.random.PRNGKey(0)
    k_param, k_x = jax.random.split(root)
    params = init_params(k_param, D, H)
    prep = prepare_params(params)     # one-time prep, hoisted out of forward
    x = jax.random.normal(k_x, (B, T, D), dtype=jnp.float32)

    out = multi_head_self_attention(x, prep, num_heads=H, causal=True)
    out = jax.block_until_ready(out)

    ref = jax.block_until_ready(reference(x, params, num_heads=H, causal=True))
    assert out.shape == (B, T, D)
    assert jnp.allclose(out, ref, atol=2e-2, rtol=2e-2), "mismatch vs reference"

    print("KERNEL_OK")
</pallas_src>

<mosaic_0001>
module attributes {stable_mosaic.version = 11 : i64} {
  func.func @_mha_kernel(%arg0: i32, %arg1: memref<16x32xf32, #tpu.memory_space<vmem>>, %arg2: memref<32x768xbf16, #tpu.memory_space<vmem>>, %arg3: memref<1x768xf32, #tpu.memory_space<vmem>>, %arg4: memref<256x32xbf16, #tpu.memory_space<vmem>>, %arg5: memref<1x32xf32, #tpu.memory_space<vmem>>, %arg6: memref<16x128xf32, #tpu.memory_space<vmem>>, %arg7: memref<128x128xf32, #tpu.memory_space<vmem>>, %arg8: memref<16x32xf32, #tpu.memory_space<vmem>>) attributes {dimension_semantics = [#tpu.dimension_semantics<arbitrary>], iteration_bounds = array<i64: 1>, scalar_prefetch = 0 : i64, scratch_operands = 0 : i64, tpu.core_type = #tpu.core_type<tc>, window_params = [{pipeline_mode = #tpu.pipeline_mode<synchronous>, transform_indices = @transform_0, window_bounds = array<i64: 16, 32>}, {pipeline_mode = #tpu.pipeline_mode<synchronous>, transform_indices = @transform_1, window_bounds = array<i64: 32, 768>}, {pipeline_mode = #tpu.pipeline_mode<synchronous>, transform_indices = @transform_2, window_bounds = array<i64: 1, 768>}, {pipeline_mode = #tpu.pipeline_mode<synchronous>, transform_indices = @transform_3, window_bounds = array<i64: 256, 32>}, {pipeline_mode = #tpu.pipeline_mode<synchronous>, transform_indices = @transform_4, window_bounds = array<i64: 1, 32>}, {pipeline_mode = #tpu.pipeline_mode<synchronous>, transform_indices = @transform_5, window_bounds = array<i64: 16, 128>}, {pipeline_mode = #tpu.pipeline_mode<synchronous>, transform_indices = @transform_6, window_bounds = array<i64: 128, 128>}, {pipeline_mode = #tpu.pipeline_mode<synchronous>, transform_indices = @transform_7, window_bounds = array<i64: 16, 32>}]} {
    %c0 = arith.constant 0 : index
    %c0_0 = arith.constant 0 : index
    %0 = vector.load %arg1[%c0, %c0_0] : memref<16x32xf32, #tpu.memory_space<vmem>>, vector<16x32xf32>
    %1 = arith.truncf %0 : vector<16x32xf32> to vector<16x32xbf16>
    %c0_1 = arith.constant 0 : index
    %c0_2 = arith.constant 0 : index
    %2 = vector.load %arg2[%c0_1, %c0_2] : memref<32x768xbf16, #tpu.memory_space<vmem>>, vector<32x768xbf16>
    %cst = arith.constant dense<0.000000e+00> : vector<16x768xf32>
    %3 = tpu.matmul %1, %2, %cst {dimension_numbers = #tpu.dot_dimension_numbers<[1], [0], [0], [1], [0, 0, 1, 1], [], []>} : vector<16x32xbf16>, vector<32x768xbf16>, vector<16x768xf32> -> vector<16x768xf32>
    %c0_3 = arith.constant 0 : index
    %c0_4 = arith.constant 0 : index
    %4 = vector.load %arg3[%c0_3, %c0_4] : memref<1x768xf32, #tpu.memory_space<vmem>>, vector<1x768xf32>
    %5 = vector.broadcast %4 : vector<1x768xf32> to vector<16x768xf32>
    %6 = arith.addf %3, %5 : vector<16x768xf32>
    %7 = vector.extract_strided_slice %6 {offsets = [0, 0], sizes = [16, 256], strides = [1, 1]} : vector<16x768xf32> to vector<16x256xf32>
    %8 = arith.truncf %7 : vector<16x256xf32> to vector<16x256xbf16>
    %9 = vector.extract_strided_slice %6 {offsets = [0, 256], sizes = [16, 256], strides = [1, 1]} : vector<16x768xf32> to vector<16x256xf32>
    %10 = arith.truncf %9 : vector<16x256xf32> to vector<16x256xbf16>
    %11 = vector.extract_strided_slice %6 {offsets = [0, 512], sizes = [16, 256], strides = [1, 1]} : vector<16x768xf32> to vector<16x256xf32>
    %12 = arith.truncf %11 : vector<16x256xf32> to vector<16x256xbf16>
    %13 = vector.extract_strided_slice %8 {offsets = [0, 0], sizes = [16, 32], strides = [1, 1]} : vector<16x256xbf16> to vector<16x32xbf16>
    %14 = vector.extract_strided_slice %10 {offsets = [0, 0], sizes = [16, 32], strides = [1, 1]} : vector<16x256xbf16> to vector<16x32xbf16>
    %cst_5 = arith.constant dense<0.000000e+00> : vector<16x16xf32>
    %15 = tpu.matmul %13, %14, %cst_5 {dimension_numbers = #tpu.dot_dimension_numbers<[1], [1], [0], [0], [0, 0, 1, 0], [], []>} : vector<16x32xbf16>, vector<16x32xbf16>, vector<16x16xf32> -> vector<16x16xf32>
    %16 = vector.extract_strided_slice %8 {offsets = [0, 32], sizes = [16, 32], strides = [1, 1]} : vector<16x256xbf16> to vector<16x32xbf16>
    %17 = vector.extract_strided_slice %10 {offsets = [0, 32], sizes = [16, 32], strides = [1, 1]} : vector<16x256xbf16> to vector<16x32xbf16>
    %cst_6 = arith.constant dense<0.000000e+00> : vector<16x16xf32>
    %18 = tpu.matmul %16, %17, %cst_6 {dimension_numbers = #tpu.dot_dimension_numbers<[1], [1], [0], [0], [0, 0, 1, 0], [], []>} : vector<16x32xbf16>, vector<16x32xbf16>, vector<16x16xf32> -> vector<16x16xf32>
    %19 = vector.extract_strided_slice %8 {offsets = [0, 64], sizes = [16, 32], strides = [1, 1]} : vector<16x256xbf16> to vector<16x32xbf16>
    %20 = vector.extract_strided_slice %10 {offsets = [0, 64], sizes = [16, 32], strides = [1, 1]} : vector<16x256xbf16> to vector<16x32xbf16>
    %cst_7 = arith.constant dense<0.000000e+00> : vector<16x16xf32>
    %21 = tpu.matmul %19, %20, %cst_7 {dimension_numbers = #tpu.dot_dimension_numbers<[1], [1], [0], [0], [0, 0, 1, 0], [], []>} : vector<16x32xbf16>, vector<16x32xbf16>, vector<16x16xf32> -> vector<16x16xf32>
    %22 = vector.extract_strided_slice %8 {offsets = [0, 96], sizes = [16, 32], strides = [1, 1]} : vector<16x256xbf16> to vector<16x32xbf16>
    %23 = vector.extract_strided_slice %10 {offsets = [0, 96], sizes = [16, 32], strides = [1, 1]} : vector<16x256xbf16> to vector<16x32xbf16>
    %cst_8 = arith.constant dense<0.000000e+00> : vector<16x16xf32>
    %24 = tpu.matmul %22, %23, %cst_8 {dimension_numbers = #tpu.dot_dimension_numbers<[1], [1], [0], [0], [0, 0, 1, 0], [], []>} : vector<16x32xbf16>, vector<16x32xbf16>, vector<16x16xf32> -> vector<16x16xf32>
    %25 = vector.extract_strided_slice %8 {offsets = [0, 128], sizes = [16, 32], strides = [1, 1]} : vector<16x256xbf16> to vector<16x32xbf16>
    %26 = vector.extract_strided_slice %10 {offsets = [0, 128], sizes = [16, 32], strides = [1, 1]} : vector<16x256xbf16> to vector<16x32xbf16>
    %cst_9 = arith.constant dense<0.000000e+00> : vector<16x16xf32>
    %27 = tpu.matmul %25, %26, %cst_9 {dimension_numbers = #tpu.dot_dimension_numbers<[1], [1], [0], [0], [0, 0, 1, 0], [], []>} : vector<16x32xbf16>, vector<16x32xbf16>, vector<16x16xf32> -> vector<16x16xf32>
    %28 = vector.extract_strided_slice %8 {offsets = [0, 160], sizes = [16, 32], strides = [1, 1]} : vector<16x256xbf16> to vector<16x32xbf16>
    %29 = vector.extract_strided_slice %10 {offsets = [0, 160], sizes = [16, 32], strides = [1, 1]} : vector<16x256xbf16> to vector<16x32xbf16>
    %cst_10 = arith.constant dense<0.000000e+00> : vector<16x16xf32>
    %30 = tpu.matmul %28, %29, %cst_10 {dimension_numbers = #tpu.dot_dimension_numbers<[1], [1], [0], [0], [0, 0, 1, 0], [], []>} : vector<16x32xbf16>, vector<16x32xbf16>, vector<16x16xf32> -> vector<16x16xf32>
    %31 = vector.extract_strided_slice %8 {offsets = [0, 192], sizes = [16, 32], strides = [1, 1]} : vector<16x256xbf16> to vector<16x32xbf16>
    %32 = vector.extract_strided_slice %10 {offsets = [0, 192], sizes = [16, 32], strides = [1, 1]} : vector<16x256xbf16> to vector<16x32xbf16>
    %cst_11 = arith.constant dense<0.000000e+00> : vector<16x16xf32>
    %33 = tpu.matmul %31, %32, %cst_11 {dimension_numbers = #tpu.dot_dimension_numbers<[1], [1], [0], [0], [0, 0, 1, 0], [], []>} : vector<16x32xbf16>, vector<16x32xbf16>, vector<16x16xf32> -> vector<16x16xf32>
    %34 = vector.extract_strided_slice %8 {offsets = [0, 224], sizes = [16, 32], strides = [1, 1]} : vector<16x256xbf16> to vector<16x32xbf16>
    %35 = vector.extract_strided_slice %10 {offsets = [0, 224], sizes = [16, 32], strides = [1, 1]} : vector<16x256xbf16> to vector<16x32xbf16>
    %cst_12 = arith.constant dense<0.000000e+00> : vector<16x16xf32>
    %36 = tpu.matmul %34, %35, %cst_12 {dimension_numbers = #tpu.dot_dimension_numbers<[1], [1], [0], [0], [0, 0, 1, 0], [], []>} : vector<16x32xbf16>, vector<16x32xbf16>, vector<16x16xf32> -> vector<16x16xf32>
    %37 = tpu.concatenate %15, %18, %21, %24, %27, %30, %33, %36 in 1 : vector<16x16xf32>, vector<16x16xf32>, vector<16x16xf32>, vector<16x16xf32>, vector<16x16xf32>, vector<16x16xf32>, vector<16x16xf32>, vector<16x16xf32> -> vector<16x128xf32>
    %c0_13 = arith.constant 0 : index
    %c0_14 = arith.constant 0 : index
    %38 = vector.load %arg6[%c0_13, %c0_14] : memref<16x128xf32, #tpu.memory_space<vmem>>, vector<16x128xf32>
    %39 = arith.addf %37, %38 : vector<16x128xf32>
    %cst_15 = arith.constant dense<0xFF800000> : vector<16xf32>
    %40 = vector.multi_reduction <maximumf>, %39, %cst_15 [1] : vector<16x128xf32> to vector<16xf32>
    %41 = vector.shape_cast %40 : vector<16xf32> to vector<16x1xf32>
    %42 = vector.broadcast %41 : vector<16x1xf32> to vector<16x128xf32>
    %43 = arith.subf %39, %42 : vector<16x128xf32>
    %44 = math.exp %43 : vector<16x128xf32>
    %c0_16 = arith.constant 0 : index
    %c0_17 = arith.constant 0 : index
    %45 = vector.load %arg7[%c0_16, %c0_17] : memref<128x128xf32, #tpu.memory_space<vmem>>, vector<128x128xf32>
    %cst_18 = arith.constant dense<0.000000e+00> : vector<16x128xf32>
    %46 = tpu.matmul %44, %45, %cst_18 {dimension_numbers = #tpu.dot_dimension_numbers<[1], [0], [0], [1], [0, 0, 1, 1], [], []>} : vector<16x128xf32>, vector<128x128xf32>, vector<16x128xf32> -> vector<16x128xf32>
    %47 = tpu.reciprocal %46 {approx = true} : vector<16x128xf32> -> vector<16x128xf32>
    %48 = arith.mulf %44, %47 : vector<16x128xf32>
    %49 = arith.truncf %48 : vector<16x128xf32> to vector<16x128xbf16>
    %50 = vector.extract_strided_slice %49 {offsets = [0, 0], sizes = [16, 16], strides = [1, 1]} : vector<16x128xbf16> to vector<16x16xbf16>
    %51 = vector.extract_strided_slice %12 {offsets = [0, 0], sizes = [16, 32], strides = [1, 1]} : vector<16x256xbf16> to vector<16x32xbf16>
    %cst_19 = arith.constant dense<0.000000e+00> : vector<16x32xf32>
    %52 = tpu.matmul %50, %51, %cst_19 {dimension_numbers = #tpu.dot_dimension_numbers<[1], [0], [0], [1], [0, 0, 1, 1], [], []>} : vector<16x16xbf16>, vector<16x32xbf16>, vector<16x32xf32> -> vector<16x32xf32>
    %53 = vector.extract_strided_slice %49 {offsets = [0, 16], sizes = [16, 16], strides = [1, 1]} : vector<16x128xbf16> to vector<16x16xbf16>
    %54 = vector.extract_strided_slice %12 {offsets = [0, 32], sizes = [16, 32], strides = [1, 1]} : vector<16x256xbf16> to vector<16x32xbf16>
    %cst_20 = arith.constant dense<0.000000e+00> : vector<16x32xf32>
    %55 = tpu.matmul %53, %54, %cst_20 {dimension_numbers = #tpu.dot_dimension_numbers<[1], [0], [0], [1], [0, 0, 1, 1], [], []>} : vector<16x16xbf16>, vector<16x32xbf16>, vector<16x32xf32> -> vector<16x32xf32>
    %56 = vector.extract_strided_slice %49 {offsets = [0, 32], sizes = [16, 16], strides = [1, 1]} : vector<16x128xbf16> to vector<16x16xbf16>
    %57 = vector.extract_strided_slice %12 {offsets = [0, 64], sizes = [16, 32], strides = [1, 1]} : vector<16x256xbf16> to vector<16x32xbf16>
    %cst_21 = arith.constant dense<0.000000e+00> : vector<16x32xf32>
    %58 = tpu.matmul %56, %57, %cst_21 {dimension_numbers = #tpu.dot_dimension_numbers<[1], [0], [0], [1], [0, 0, 1, 1], [], []>} : vector<16x16xbf16>, vector<16x32xbf16>, vector<16x32xf32> -> vector<16x32xf32>
    %59 = vector.extract_strided_slice %49 {offsets = [0, 48], sizes = [16, 16], strides = [1, 1]} : vector<16x128xbf16> to vector<16x16xbf16>
    %60 = vector.extract_strided_slice %12 {offsets = [0, 96], sizes = [16, 32], strides = [1, 1]} : vector<16x256xbf16> to vector<16x32xbf16>
    %cst_22 = arith.constant dense<0.000000e+00> : vector<16x32xf32>
    %61 = tpu.matmul %59, %60, %cst_22 {dimension_numbers = #tpu.dot_dimension_numbers<[1], [0], [0], [1], [0, 0, 1, 1], [], []>} : vector<16x16xbf16>, vector<16x32xbf16>, vector<16x32xf32> -> vector<16x32xf32>
    %62 = vector.extract_strided_slice %49 {offsets = [0, 64], sizes = [16, 16], strides = [1, 1]} : vector<16x128xbf16> to vector<16x16xbf16>
    %63 = vector.extract_strided_slice %12 {offsets = [0, 128], sizes = [16, 32], strides = [1, 1]} : vector<16x256xbf16> to vector<16x32xbf16>
    %cst_23 = arith.constant dense<0.000000e+00> : vector<16x32xf32>
    %64 = tpu.matmul %62, %63, %cst_23 {dimension_numbers = #tpu.dot_dimension_numbers<[1], [0], [0], [1], [0, 0, 1, 1], [], []>} : vector<16x16xbf16>, vector<16x32xbf16>, vector<16x32xf32> -> vector<16x32xf32>
    %65 = vector.extract_strided_slice %49 {offsets = [0, 80], sizes = [16, 16], strides = [1, 1]} : vector<16x128xbf16> to vector<16x16xbf16>
    %66 = vector.extract_strided_slice %12 {offsets = [0, 160], sizes = [16, 32], strides = [1, 1]} : vector<16x256xbf16> to vector<16x32xbf16>
    %cst_24 = arith.constant dense<0.000000e+00> : vector<16x32xf32>
    %67 = tpu.matmul %65, %66, %cst_24 {dimension_numbers = #tpu.dot_dimension_numbers<[1], [0], [0], [1], [0, 0, 1, 1], [], []>} : vector<16x16xbf16>, vector<16x32xbf16>, vector<16x32xf32> -> vector<16x32xf32>
    %68 = vector.extract_strided_slice %49 {offsets = [0, 96], sizes = [16, 16], strides = [1, 1]} : vector<16x128xbf16> to vector<16x16xbf16>
    %69 = vector.extract_strided_slice %12 {offsets = [0, 192], sizes = [16, 32], strides = [1, 1]} : vector<16x256xbf16> to vector<16x32xbf16>
    %cst_25 = arith.constant dense<0.000000e+00> : vector<16x32xf32>
    %70 = tpu.matmul %68, %69, %cst_25 {dimension_numbers = #tpu.dot_dimension_numbers<[1], [0], [0], [1], [0, 0, 1, 1], [], []>} : vector<16x16xbf16>, vector<16x32xbf16>, vector<16x32xf32> -> vector<16x32xf32>
    %71 = vector.extract_strided_slice %49 {offsets = [0, 112], sizes = [16, 16], strides = [1, 1]} : vector<16x128xbf16> to vector<16x16xbf16>
    %72 = vector.extract_strided_slice %12 {offsets = [0, 224], sizes = [16, 32], strides = [1, 1]} : vector<16x256xbf16> to vector<16x32xbf16>
    %cst_26 = arith.constant dense<0.000000e+00> : vector<16x32xf32>
    %73 = tpu.matmul %71, %72, %cst_26 {dimension_numbers = #tpu.dot_dimension_numbers<[1], [0], [0], [1], [0, 0, 1, 1], [], []>} : vector<16x16xbf16>, vector<16x32xbf16>, vector<16x32xf32> -> vector<16x32xf32>
    %74 = tpu.concatenate %52, %55, %58, %61, %64, %67, %70, %73 in 1 : vector<16x32xf32>, vector<16x32xf32>, vector<16x32xf32>, vector<16x32xf32>, vector<16x32xf32>, vector<16x32xf32>, vector<16x32xf32>, vector<16x32xf32> -> vector<16x256xf32>
    %75 = arith.truncf %74 : vector<16x256xf32> to vector<16x256xbf16>
    %c0_27 = arith.constant 0 : index
    %c0_28 = arith.constant 0 : index
    %76 = vector.load %arg4[%c0_27, %c0_28] : memref<256x32xbf16, #tpu.memory_space<vmem>>, vector<256x32xbf16>
    %cst_29 = arith.constant dense<0.000000e+00> : vector<16x32xf32>
    %77 = tpu.matmul %75, %76, %cst_29 {dimension_numbers = #tpu.dot_dimension_numbers<[1], [0], [0], [1], [0, 0, 1, 1], [], []>} : vector<16x256xbf16>, vector<256x32xbf16>, vector<16x32xf32> -> vector<16x32xf32>
    %c0_30 = arith.constant 0 : index
    %c0_31 = arith.constant 0 : index
    %78 = vector.load %arg5[%c0_30, %c0_31] : memref<1x32xf32, #tpu.memory_space<vmem>>, vector<1x32xf32>
    %79 = vector.broadcast %78 : vector<1x32xf32> to vector<16x32xf32>
    %80 = arith.addf %77, %79 : vector<16x32xf32>
    %c0_32 = arith.constant 0 : index
    %c0_33 = arith.constant 0 : index
    %81 = vector.load %arg8[%c0_32, %c0_33] : memref<16x32xf32, #tpu.memory_space<vmem>>, vector<16x32xf32>
    tpu.vector_store %arg8[%c0_32, %c0_33], %80 {strides = array<i32>} : memref<16x32xf32, #tpu.memory_space<vmem>>, vector<16x32xf32>,
    return
  }
  func.func @transform_0(%arg0: i32) -> (i32, i32) {
    %c0_i32 = arith.constant 0 : i32
    %c0_i32_0 = arith.constant 0 : i32
    %c0_i32_1 = arith.constant 0 : i32
    return %c0_i32, %c0_i32_0 : i32, i32
  }
  func.func @transform_1(%arg0: i32) -> (i32, i32) {
    %c0_i32 = arith.constant 0 : i32
    %c0_i32_0 = arith.constant 0 : i32
    %c0_i32_1 = arith.constant 0 : i32
    return %c0_i32, %c0_i32_0 : i32, i32
  }
  func.func @transform_2(%arg0: i32) -> (i32, i32) {
    %c0_i32 = arith.constant 0 : i32
    %c0_i32_0 = arith.constant 0 : i32
    %c0_i32_1 = arith.constant 0 : i32
    return %c0_i32, %c0_i32_0 : i32, i32
  }
  func.func @transform_3(%arg0: i32) -> (i32, i32) {
    %c0_i32 = arith.constant 0 : i32
    %c0_i32_0 = arith.constant 0 : i32
    %c0_i32_1 = arith.constant 0 : i32
    return %c0_i32, %c0_i32_0 : i32, i32
  }
  func.func @transform_4(%arg0: i32) -> (i32, i32) {
    %c0_i32 = arith.constant 0 : i32
    %c0_i32_0 = arith.constant 0 : i32
    %c0_i32_1 = arith.constant 0 : i32
    return %c0_i32, %c0_i32_0 : i32, i32
  }
  func.func @transform_5(%arg0: i32) -> (i32, i32) {
    %c0_i32 = arith.constant 0 : i32
    %c0_i32_0 = arith.constant 0 : i32
    %c0_i32_1 = arith.constant 0 : i32
    return %c0_i32, %c0_i32_0 : i32, i32
  }
  func.func @transform_6(%arg0: i32) -> (i32, i32) {
    %c0_i32 = arith.constant 0 : i32
    %c0_i32_0 = arith.constant 0 : i32
    %c0_i32_1 = arith.constant 0 : i32
    return %c0_i32, %c0_i32_0 : i32, i32
  }
  func.func @transform_7(%arg0: i32) -> (i32, i32) {
    %c0_i32 = arith.constant 0 : i32
    %c0_i32_0 = arith.constant 0 : i32
    %c0_i32_1 = arith.constant 0 : i32
    return %c0_i32, %c0_i32_0 : i32, i32
  }
}

</mosaic_0001>

<llo_original>
// kernel: tile.9
$region0: #{tile.9}
  %s0 = inlined_call_operand.vmem [shape: f32[16,8,16], index: 0, kind: input, shape index: {}]
  %s1 = inlined_call_operand.vmem [shape: f32[16,128], index: 1, kind: output, shape index: {}]
  %v2 = vld [vmem:[%s0] ss:$8 sm:$0xf]
  %v3 = vld [vmem:[%s0] ss:$8 sm:$0xf0]
  %vm4 = vcmask 1047556
  %v5 = vsel %vm4, %v3, %v2
  %vm6 = vcmask 130048
  %7 = vst.msk [vmem:[%s1] sm:$0xff] %vm6, %v5
  %s8 = scalar_lea.vmem %s0, 64
  %v9 = vld [vmem:[%s8] ss:$8 sm:$0xf]
  %s10 = scalar_lea.vmem %s0, 64
  %v11 = vld [vmem:[%s10] ss:$8 sm:$0xf0]
  %vm12 = vcmask 1047556
  %v13 = vsel %vm12, %v11, %v9
  %vm14 = vcmask 130048
  %s15 = scalar_lea.vmem %s1, 8
  %16 = vst.msk [vmem:[%s15] sm:$0xff] %vm14, %v13
  %s17 = scalar_lea.vmem %s0, 7
  %v18 = vld [vmem:[%s17] ss:$8 sm:$0xf]
  %s19 = scalar_lea.vmem %s0, 7
  %v20 = vld [vmem:[%s19] ss:$8 sm:$0xf0]
  %vm21 = vcmask 1047556
  %v22 = vsel %vm21, %v20, %v18
  %23 = vrot.lane.b32.xlu0 %v22, 112
  %v24 = vpop.permute.xlu0 %23
  %vm25 = vcmask 1048448
  %26 = vst.msk [vmem:[%s1] sm:$0xff] %vm25, %v24
  %s27 = scalar_lea.vmem %s0, 71
  %v28 = vld [vmem:[%s27] ss:$8 sm:$0xf]
  %s29 = scalar_lea.vmem %s0, 71
  %v30 = vld [vmem:[%s29] ss:$8 sm:$0xf0]
  %vm31 = vcmask 1047556
  %v32 = vsel %vm31, %v30, %v28
  %33 = vrot.lane.b32.xlu0 %v32, 112
  %v34 = vpop.permute.xlu0 %33
  %vm35 = vcmask 1048448
  %s36 = scalar_lea.vmem %s1, 8
  %37 = vst.msk [vmem:[%s36] sm:$0xff] %vm35, %v34
  %s38 = scalar_lea.vmem %s0, 6
  %v39 = vld [vmem:[%s38] ss:$8 sm:$0xf]
  %s40 = scalar_lea.vmem %s0, 6
  %v41 = vld [vmem:[%s40] ss:$8 sm:$0xf0]
  %vm42 = vcmask 1047556
  %v43 = vsel %vm42, %v41, %v39
  %44 = vrot.lane.b32.xlu0 %v43, 96
  %v45 = vpop.permute.xlu0 %44
  %vm46 = vcmask 917248
  %47 = vst.msk [vmem:[%s1] sm:$0xff] %vm46, %v45
  %s48 = scalar_lea.vmem %s0, 70
  %v49 = vld [vmem:[%s48] ss:$8 sm:$0xf]
  %s50 = scalar_lea.vmem %s0, 70
  %v51 = vld [vmem:[%s50] ss:$8 sm:$0xf0]
  %vm52 = vcmask 1047556
  %v53 = vsel %vm52, %v51, %v49
  %54 = vrot.lane.b32.xlu0 %v53, 96
  %v55 = vpop.permute.xlu0 %54
  %vm56 = vcmask 917248
  %s57 = scalar_lea.vmem %s1, 8
  %58 = vst.msk [vmem:[%s57] sm:$0xff] %vm56, %v55
  %s59 = scalar_lea.vmem %s0, 5
  %v60 = vld [vmem:[%s59] ss:$8 sm:$0xf]
  %s61 = scalar_lea.vmem %s0, 5
  %v62 = vld [vmem:[%s61] ss:$8 sm:$0xf0]
  %vm63 = vcmask 1047556
  %v64 = vsel %vm63, %v62, %v60
  %65 = vrot.lane.b32.xlu0 %v64, 80
  %v66 = vpop.permute.xlu0 %65
  %vm67 = vcmask 786048
  %68 = vst.msk [vmem:[%s1] sm:$0xff] %vm67, %v66
  %s69 = scalar_lea.vmem %s0, 69
  %v70 = vld [vmem:[%s69] ss:$8 sm:$0xf]
  %s71 = scalar_lea.vmem %s0, 69
  %v72 = vld [vmem:[%s71] ss:$8 sm:$0xf0]
  %vm73 = vcmask 1047556
  %v74 = vsel %vm73, %v72, %v70
  %75 = vrot.lane.b32.xlu0 %v74, 80
  %v76 = vpop.permute.xlu0 %75
  %vm77 = vcmask 786048
  %s78 = scalar_lea.vmem %s1, 8
  %79 = vst.msk [vmem:[%s78] sm:$0xff] %vm77, %v76
  %s80 = scalar_lea.vmem %s0, 4
  %v81 = vld [vmem:[%s80] ss:$8 sm:$0xf]
  %s82 = scalar_lea.vmem %s0, 4
  %v83 = vld [vmem:[%s82] ss:$8 sm:$0xf0]
  %vm84 = vcmask 1047556
  %v85 = vsel %vm84, %v83, %v81
  %86 = vrot.lane.b32.xlu0 %v85, 64
  %v87 = vpop.permute.xlu0 %86
  %vm88 = vcmask 654848
  %89 = vst.msk [vmem:[%s1] sm:$0xff] %vm88, %v87
  %s90 = scalar_lea.vmem %s0, 68
  %v91 = vld [vmem:[%s90] ss:$8 sm:$0xf]
  %s92 = scalar_lea.vmem %s0, 68
  %v93 = vld [vmem:[%s92] ss:$8 sm:$0xf0]
  %vm94 = vcmask 1047556
  %v95 = vsel %vm94, %v93, %v91
  %96 = vrot.lane.b32.xlu0 %v95, 64
  %v97 = vpop.permute.xlu0 %96
  %vm98 = vcmask 654848
  %s99 = scalar_lea.vmem %s1, 8
  %100 = vst.msk [vmem:[%s99] sm:$0xff] %vm98, %v97
  %s101 = scalar_lea.vmem %s0, 3
  %v102 = vld [vmem:[%s101] ss:$8 sm:$0xf]
  %s103 = scalar_lea.vmem %s0, 3
  %v104 = vld [vmem:[%s103] ss:$8 sm:$0xf0]
  %vm105 = vcmask 1047556
  %v106 = vsel %vm105, %v104, %v102
  %107 = vrot.lane.b32.xlu0 %v106, 48
  %v108 = vpop.permute.xlu0 %107
  %vm109 = vcmask 523648
  %110 = vst.msk [vmem:[%s1] sm:$0xff] %vm109, %v108
  %s111 = scalar_lea.vmem %s0, 67
  %v112 = vld [vmem:[%s111] ss:$8 sm:$0xf]
  %s113 = scalar_lea.vmem %s0, 67
  %v114 = vld [vmem:[%s113] ss:$8 sm:$0xf0]
  %vm115 = vcmask 1047556
  %v116 = vsel %vm115, %v114, %v112
  %117 = vrot.lane.b32.xlu0 %v116, 48
  %v118 = vpop.permute.xlu0 %117
  %vm119 = vcmask 523648
  %s120 = scalar_lea.vmem %s1, 8
  %121 = vst.msk [vmem:[%s120] sm:$0xff] %vm119, %v118
  %s122 = scalar_lea.vmem %s0, 2
  %v123 = vld [vmem:[%s122] ss:$8 sm:$0xf]
  %s124 = scalar_lea.vmem %s0, 2
  %v125 = vld [vmem:[%s124] ss:$8 sm:$0xf0]
  %vm126 = vcmask 1047556
  %v127 = vsel %vm126, %v125, %v123
  %128 = vrot.lane.b32.xlu0 %v127, 32
  %v129 = vpop.permute.xlu0 %128
  %vm130 = vcmask 392448
  %131 = vst.msk [vmem:[%s1] sm:$0xff] %vm130, %v129
  %s132 = scalar_lea.vmem %s0, 66
  %v133 = vld [vmem:[%s132] ss:$8 sm:$0xf]
  %s134 = scalar_lea.vmem %s0, 66
  %v135 = vld [vmem:[%s134] ss:$8 sm:$0xf0]
  %vm136 = vcmask 1047556
  %v137 = vsel %vm136, %v135, %v133
  %138 = vrot.lane.b32.xlu0 %v137, 32
  %v139 = vpop.permute.xlu0 %138
  %vm140 = vcmask 392448
  %s141 = scalar_lea.vmem %s1, 8
  %142 = vst.msk [vmem:[%s141] sm:$0xff] %vm140, %v139
  %s143 = scalar_lea.vmem %s0, 1
  %v144 = vld [vmem:[%s143] ss:$8 sm:$0xf]
  %s145 = scalar_lea.vmem %s0, 1
  %v146 = vld [vmem:[%s145] ss:$8 sm:$0xf0]
  %vm147 = vcmask 1047556
  %v148 = vsel %vm147, %v146, %v144
  %149 = vrot.lane.b32.xlu0 %v148, 16
  %v150 = vpop.permute.xlu0 %149
  %vm151 = vcmask 261248
  %152 = vst.msk [vmem:[%s1] sm:$0xff] %vm151, %v150
  %s153 = scalar_lea.vmem %s0, 65
  %v154 = vld [vmem:[%s153] ss:$8 sm:$0xf]
  %s155 = scalar_lea.vmem %s0, 65
  %v156 = vld [vmem:[%s155] ss:$8 sm:$0xf0]
  %vm157 = vcmask 1047556
  %v158 = vsel %vm157, %v156, %v154
  %159 = vrot.lane.b32.xlu0 %v158, 16
  %v160 = vpop.permute.xlu0 %159
  %vm161 = vcmask 261248
  %s162 = scalar_lea.vmem %s1, 8
  %163 = vst.msk [vmem:[%s162] sm:$0xff] %vm161, %v160

// kernel: multi_head_self_attention.1
$region0: #{multi_head_self_attention.1}
  #allocation0 [shape = 'u32[]', space=smem, size = 0x4, offset = 0x4, fixed_abs, tag = 'smem constant byte address 0x4 - core index']
  #allocation1 [shape = 'u32[144,128]{1,0:T(1,128)}', space=vmem, size = 0x12000, scoped, tag = 'internal scratch']
  %s0 = inlined_call_operand.vmem [shape: f32[16,32], index: 0, kind: input, shape index: {}]
  %s1 = inlined_call_operand.vmem [shape: bf16[32,768], index: 1, kind: input, shape index: {}]
  %s2 = inlined_call_operand.vmem [shape: f32[1,768], index: 2, kind: input, shape index: {}]
  %s3 = inlined_call_operand.vmem [shape: bf16[256,32], index: 3, kind: input, shape index: {}]
  %s4 = inlined_call_operand.vmem [shape: f32[1,32], index: 4, kind: input, shape index: {}]
  %s5 = inlined_call_operand.vmem [shape: f32[16,128], index: 5, kind: input, shape index: {}]
  %s6 = inlined_call_operand.vmem [shape: f32[128,128], index: 6, kind: input, shape index: {}]
  %s7 = inlined_call_operand.hbm [shape: f32[16,32], index: 7, kind: output, shape index: {}]
  %s8 = sld [smem:[#allocation0]]
  $region38: #{multi_head_self_attention.1} parent=0
    _
  %s10 = ssub.s32 1, %s8
  %s11 = scalar_select 0, %s10, %s8
  $region1: #{multi_head_self_attention.1} parent=0
    #allocation2 [shape = 'u8[8192]{0}', space=vmem, size = 0x2000, scoped, tag = 'output window, operand 0, single buffered']
    #allocation3 [shape = 's32[1]{0}', space=sflag, size = 0x4, scoped, tag = 'scoped memory for multi_head_self_attention.1']
    %12 = vsyncpa [#allocation3], 0
    // Predicated region
    $region2: #{multi_head_self_attention.1} parent=1 // pred_check
      _
    $region3: #{multi_head_self_attention.1} parent=1 // pred_check_branch
      %14 = sbr.rel (0) target = $region5
    $region4: #{multi_head_self_attention.1} parent=1 // pred_region
      _
    $region5: #{multi_head_self_attention.1} parent=1 // pred_fallthru
      _
    // Predicated region
    $region6: #{multi_head_self_attention.1} parent=1 // pred_check
      _
    $region7: #{multi_head_self_attention.1} parent=1 // pred_check_branch
      %16 = sbr.rel (0) target = $region9
    $region8: #{multi_head_self_attention.1} parent=1 // pred_region
      _
    $region9: #{multi_head_self_attention.1} parent=1 // pred_fallthru
      _
    // Predicated region
    $region10: #{multi_head_self_attention.1} parent=1 // pred_check
      _
    $region11: #{multi_head_self_attention.1} parent=1 // pred_check_branch
      %18 = sbr.rel (0) target = $region13
    $region12: #{multi_head_self_attention.1} parent=1 // pred_region
      _
    $region13: #{multi_head_self_attention.1} parent=1 // pred_fallthru
      _
    // Predicated region
    $region14: #{multi_head_self_attention.1} parent=1 // pred_check
      _
    $region15: #{multi_head_self_attention.1} parent=1 // pred_check_branch
      %20 = sbr.rel (0) target = $region17
    $region16: #{multi_head_self_attention.1} parent=1 // pred_region
      _
    $region17: #{multi_head_self_attention.1} parent=1 // pred_fallthru
      _
    // Predicated region
    $region18: #{multi_head_self_attention.1} parent=1 // pred_check
      _
    $region19: #{multi_head_self_attention.1} parent=1 // pred_check_branch
      %22 = sbr.rel (0) target = $region21
    $region20: #{multi_head_self_attention.1} parent=1 // pred_region
      _
    $region21: #{multi_head_self_attention.1} parent=1 // pred_fallthru
      _
    // Predicated region
    $region22: #{multi_head_self_attention.1} parent=1 // pred_check
      _
    $region23: #{multi_head_self_attention.1} parent=1 // pred_check_branch
      %24 = sbr.rel (0) target = $region25
    $region24: #{multi_head_self_attention.1} parent=1 // pred_region
      _
    $region25: #{multi_head_self_attention.1} parent=1 // pred_fallthru
      _
    // Predicated region
    $region26: #{multi_head_self_attention.1} parent=1 // pred_check
      _
    $region27: #{multi_head_self_attention.1} parent=1 // pred_check_branch
      %26 = sbr.rel (0) target = $region29
    $region28: #{multi_head_self_attention.1} parent=1 // pred_region
      _
    $region29: #{multi_head_self_attention.1} parent=1 // pred_fallthru
      _
    %v28 = vld [vmem:[%s0] sm:$0xff]
    %v29 = vld [vmem:[%s0 + $0x8] sm:$0xff]
    %v30 = vpack.c.bf16 %v29, %v28
    %v31 = vld [vmem:[%s1] sm:$0xff]
    %v32 = vld [vmem:[%s1 + $0x8] sm:$0xff]
    %v33 = vld [vmem:[%s1 + $0x10] sm:$0xff]
    %v34 = vld [vmem:[%s1 + $0x18] sm:$0xff]
    %v35 = vld [vmem:[%s1 + $0x20] sm:$0xff]
    %v36 = vld [vmem:[%s1 + $0x28] sm:$0xff]
    %v37 = vld [vmem:[%s1 + $0x30] sm:$0xff]
    %v38 = vld [vmem:[%s1 + $0x38] sm:$0xff]
    %v39 = vld [vmem:[%s1 + $0x40] sm:$0xff]
    %v40 = vld [vmem:[%s1 + $0x48] sm:$0xff]
    %v41 = vld [vmem:[%s1 + $0x50] sm:$0xff]
    %v42 = vld [vmem:[%s1 + $0x58] sm:$0xff]
    %v43 = vld [vmem:[%s2] sm:$0x3f]
    %v45 = vlaneseq
    %v46 = vshrl.u32 %v45, 7
    %v47 = vsub.s32 0, %v46
    %v48 = vrot.slane %v43, %v47
    %v49 = vlaneseq
    %v50 = vshrl.u32 %v49, 7
    %v51 = vsub.s32 1, %v50
    %v52 = vrot.slane %v43, %v51
    %v53 = vlaneseq
    %v54 = vshrl.u32 %v53, 7
    %v55 = vsub.s32 2, %v54
    %v56 = vrot.slane %v43, %v55
    %v57 = vlaneseq
    %v58 = vshrl.u32 %v57, 7
    %v59 = vsub.s32 3, %v58
    %v60 = vrot.slane %v43, %v59
    %v61 = vlaneseq
    %v62 = vshrl.u32 %v61, 7
    %v63 = vsub.s32 4, %v62
    %v64 = vrot.slane %v43, %v63
    %v65 = vlaneseq
    %v66 = vshrl.u32 %v65, 7
    %v67 = vsub.s32 5, %v66
    %v68 = vrot.slane %v43, %v67
    %v87 = vunpack.c.l.b16 %v31
    %v88 = vunpack.c.h.b16 %v31
    %v89 = vunpack.c.l.b16 %v32
    %v90 = vunpack.c.h.b16 %v32
    %v91 = vunpack.c.l.b16 %v33
    %v92 = vunpack.c.h.b16 %v33
    %v93 = vunpack.c.l.b16 %v34
    %v94 = vunpack.c.h.b16 %v34
    %v95 = vunpack.c.l.b16 %v35
    %v96 = vunpack.c.h.b16 %v35
    %v97 = vunpack.c.l.b16 %v36
    %v98 = vunpack.c.h.b16 %v36
    %v99 = vunpack.c.l.b16 %v37
    %v100 = vunpack.c.h.b16 %v37
    %v101 = vunpack.c.l.b16 %v38
    %v102 = vunpack.c.h.b16 %v38
    %v103 = vunpack.c.l.b16 %v39
    %v104 = vunpack.c.h.b16 %v39
    %v105 = vunpack.c.l.b16 %v40
    %v106 = vunpack.c.h.b16 %v40
    %v107 = vunpack.c.l.b16 %v41
    %v108 = vunpack.c.h.b16 %v41
    %v109 = vunpack.c.l.b16 %v42
    %v110 = vunpack.c.h.b16 %v42
    %v111 = vpack.c.b16 %v93, %v87
    %v112 = vpack.c.b16 %v94, %v88
    %v113 = vpack.c.b16 %v95, %v89
    %v114 = vpack.c.b16 %v96, %v90
    %v115 = vpack.c.b16 %v97, %v91
    %v116 = vpack.c.b16 %v98, %v92
    %v117 = vpack.c.b16 %v105, %v99
    %v118 = vpack.c.b16 %v106, %v100
    %v119 = vpack.c.b16 %v107, %v101
    %v120 = vpack.c.b16 %v108, %v102
    %v121 = vpack.c.b16 %v109, %v103
    %v122 = vpack.c.b16 %v110, %v104
    %vm135 = vcmask 261120
    %v137 = vsel %vm135, %v30, 0
    %139 = vmatprep.subr.bf16.mxu0 %v112
    %140 = vmatpush1.bf16.msra.mxu0 %v111
    %141 = vmatprep.subr.bf16.mxu0 %v118
    %142 = vmatpush1.bf16.msra.mxu0 %v117
    %143 = vmatprep.subr.bf16.mxu0 0
    %144 = vmatpush1.bf16.msra.mxu0 0
    %145 = vmatprep.subr.bf16.mxu0 0
    %146 = vmatpush1.bf16.msra.mxu0 0
    %147 = vmatprep.subr.bf16.mxu0 0
    %148 = vmatpush1.bf16.msra.mxu0 0
    %149 = vmatprep.subr.bf16.mxu0 0
    %150 = vmatpush1.bf16.msra.mxu0 0
    %151 = vmatprep.subr.bf16.mxu0 0
    %152 = vmatpush1.bf16.msra.mxu0 0
    %153 = vmatprep.subr.bf16.mxu0 0
    %154 = vmatpush1.bf16.msra.mxu0 0
    %155 = vmatprep.subr.bf16.mxu0 0
    %156 = vmatpush1.bf16.msra.mxu0 0
    %157 = vmatprep.subr.bf16.mxu0 0
    %158 = vmatpush1.bf16.msra.mxu0 0
    %159 = vmatprep.subr.bf16.mxu0 0
    %160 = vmatpush1.bf16.msra.mxu0 0
    %161 = vmatprep.subr.bf16.mxu0 0
    %162 = vmatpush1.bf16.msra.mxu0 0
    %163 = vmatprep.subr.bf16.mxu0 0
    %164 = vmatpush1.bf16.msra.mxu0 0
    %165 = vmatprep.subr.bf16.mxu0 0
    %166 = vmatpush1.bf16.msra.mxu0 0
    %167 = vmatprep.subr.bf16.mxu0 0
    %168 = vmatpush1.bf16.msra.mxu0 0
    %169 = vmatprep.subr.bf16.mxu0 0
    %170 = vmatpush1.bf16.msra.mxu0 0
    %171 = vmatprep.mubr.bf16.mxu0 0
    %172 = vmatmul.mubr.bf16.gmra.mrb[0].mxu0 %v137
    %v173 = vpop.f32.mrb[0].mxu0
    %v174 = vadd.f32 %v48, %v173
    %v175 = vpop.f32.mrb[0].mxu0
    %v176 = vadd.f32 %v52, %v175
    %v177 = vpop.f32.mrb[0].mxu0
    %v178 = vadd.f32 %v48, %v177
    %v179 = vpop.f32.mrb[0].mxu0
    %v180 = vadd.f32 %v52, %v179
    %181 = vdwg.mxu0
    %182 = vmatprep.subr.bf16.mxu0 %v114
    %183 = vmatpush1.bf16.msra.mxu0 %v113
    %184 = vmatprep.subr.bf16.mxu0 %v120
    %185 = vmatpush1.bf16.msra.mxu0 %v119
    %186 = vmatprep.subr.bf16.mxu0 0
    %187 = vmatpush1.bf16.msra.mxu0 0
    %188 = vmatprep.subr.bf16.mxu0 0
    %189 = vmatpush1.bf16.msra.mxu0 0
    %190 = vmatprep.subr.bf16.mxu0 0
    %191 = vmatpush1.bf16.msra.mxu0 0
    %192 = vmatprep.subr.bf16.mxu0 0
    %193 = vmatpush1.bf16.msra.mxu0 0
    %194 = vmatprep.subr.bf16.mxu0 0
    %195 = vmatpush1.bf16.msra.mxu0 0
    %196 = vmatprep.subr.bf16.mxu0 0
    %197 = vmatpush1.bf16.msra.mxu0 0
    %198 = vmatprep.subr.bf16.mxu0 0
    %199 = vmatpush1.bf16.msra.mxu0 0
    %200 = vmatprep.subr.bf16.mxu0 0
    %201 = vmatpush1.bf16.msra.mxu0 0
    %202 = vmatprep.subr.bf16.mxu0 0
    %203 = vmatpush1.bf16.msra.mxu0 0
    %204 = vmatprep.subr.bf16.mxu0 0
    %205 = vmatpush1.bf16.msra.mxu0 0
    %206 = vmatprep.subr.bf16.mxu0 0
    %207 = vmatpush1.bf16.msra.mxu0 0
    %208 = vmatprep.subr.bf16.mxu0 0
    %209 = vmatpush1.bf16.msra.mxu0 0
    %210 = vmatprep.subr.bf16.mxu0 0
    %211 = vmatpush1.bf16.msra.mxu0 0
    %212 = vmatprep.subr.bf16.mxu0 0
    %213 = vmatpush1.bf16.msra.mxu0 0
    %214 = vmatprep.mubr.bf16.mxu0 0
    %215 = vmatmul.mubr.bf16.gmra.mrb[0].mxu0 %v137
    %v216 = vpop.f32.mrb[0].mxu0
    %v217 = vadd.f32 %v56, %v216
    %v218 = vpop.f32.mrb[0].mxu0
    %v219 = vadd.f32 %v60, %v218
    %v220 = vpop.f32.mrb[0].mxu0
    %v221 = vadd.f32 %v56, %v220
    %v222 = vpop.f32.mrb[0].mxu0
    %v223 = vadd.f32 %v60, %v222
    %224 = vdwg.mxu0
    %225 = vmatprep.subr.bf16.mxu0 %v116
    %226 = vmatpush1.bf16.msra.mxu0 %v115
    %227 = vmatprep.subr.bf16.mxu0 %v122
    %228 = vmatpush1.bf16.msra.mxu0 %v121
    %229 = vmatprep.subr.bf16.mxu0 0
    %230 = vmatpush1.bf16.msra.mxu0 0
    %231 = vmatprep.subr.bf16.mxu0 0
    %232 = vmatpush1.bf16.msra.mxu0 0
    %233 = vmatprep.subr.bf16.mxu0 0
    %234 = vmatpush1.bf16.msra.mxu0 0
    %235 = vmatprep.subr.bf16.mxu0 0
    %236 = vmatpush1.bf16.msra.mxu0 0
    %237 = vmatprep.subr.bf16.mxu0 0
    %238 = vmatpush1.bf16.msra.mxu0 0
    %239 = vmatprep.subr.bf16.mxu0 0
    %240 = vmatpush1.bf16.msra.mxu0 0
    %241 = vmatprep.subr.bf16.mxu0 0
    %242 = vmatpush1.bf16.msra.mxu0 0
    %243 = vmatprep.subr.bf16.mxu0 0
    %244 = vmatpush1.bf16.msra.mxu0 0
    %245 = vmatprep.subr.bf16.mxu0 0
    %246 = vmatpush1.bf16.msra.mxu0 0
    %247 = vmatprep.subr.bf16.mxu0 0
    %248 = vmatpush1.bf16.msra.mxu0 0
    %249 = vmatprep.subr.bf16.mxu0 0
    %250 = vmatpush1.bf16.msra.mxu0 0
    %251 = vmatprep.subr.bf16.mxu0 0
    %252 = vmatpush1.bf16.msra.mxu0 0
    %253 = vmatprep.subr.bf16.mxu0 0
    %254 = vmatpush1.bf16.msra.mxu0 0
    %255 = vmatprep.subr.bf16.mxu0 0
    %256 = vmatpush1.bf16.msra.mxu0 0
    %257 = vmatprep.mubr.bf16.mxu0 0
    %258 = vmatmul.mubr.bf16.gmra.mrb[0].mxu0 %v137
    %v259 = vpop.f32.mrb[0].mxu0
    %v260 = vadd.f32 %v64, %v259
    %v261 = vpop.f32.mrb[0].mxu0
    %v262 = vadd.f32 %v68, %v261
    %v263 = vpop.f32.mrb[0].mxu0
    %v264 = vadd.f32 %v64, %v263
    %v265 = vpop.f32.mrb[0].mxu0
    %v266 = vadd.f32 %v68, %v265
    %267 = vdwg.mxu0
    %v268 = vpack.c.bf16 %v178, %v174
    %v269 = vpack.c.bf16 %v180, %v176
    %v270 = vpack.c.bf16 %v221, %v217
    %v271 = vpack.c.bf16 %v223, %v219
    %v272 = vpack.c.bf16 %v264, %v260
    %v273 = vpack.c.bf16 %v266, %v262
    %v275 = vsel %vm135, %v268, 0
    %v278 = vsel %vm135, %v270, 0
    %280 = vmatprep.subr.bf16.mxu0 0
    %281 = vmatpush1.bf16.xpose.msra.mxu0 %v278
    %282 = vmatprep.subr.bf16.mxu0 0
    %283 = vmatpush1.bf16.xpose.msra.mxu0 0
    %284 = vmatprep.subr.bf16.mxu0 0
    %285 = vmatpush1.bf16.xpose.msra.mxu0 0
    %286 = vmatprep.subr.bf16.mxu0 0
    %287 = vmatpush1.bf16.xpose.msra.mxu0 0
    %288 = vmatprep.subr.bf16.mxu0 0
    %289 = vmatpush1.bf16.xpose.msra.mxu0 0
    %290 = vmatprep.subr.bf16.mxu0 0
    %291 = vmatpush1.bf16.xpose.msra.mxu0 0
    %292 = vmatprep.subr.bf16.mxu0 0
    %293 = vmatpush1.bf16.xpose.msra.mxu0 0
    %294 = vmatprep.subr.bf16.mxu0 0
    %295 = vmatpush1.bf16.xpose.msra.mxu0 0
    %296 = vmatprep.subr.bf16.mxu0 0
    %297 = vmatpush1.bf16.xpose.msra.mxu0 0
    %298 = vmatprep.subr.bf16.mxu0 0
    %299 = vmatpush1.bf16.xpose.msra.mxu0 0
    %300 = vmatprep.subr.bf16.mxu0 0
    %301 = vmatpush1.bf16.xpose.msra.mxu0 0
    %302 = vmatprep.subr.bf16.mxu0 0
    %303 = vmatpush1.bf16.xpose.msra.mxu0 0
    %304 = vmatprep.subr.bf16.mxu0 0
    %305 = vmatpush1.bf16.xpose.msra.mxu0 0
    %306 = vmatprep.subr.bf16.mxu0 0
    %307 = vmatpush1.bf16.xpose.msra.mxu0 0
    %308 = vmatprep.subr.bf16.mxu0 0
    %309 = vmatpush1.bf16.xpose.msra.mxu0 0
    %310 = vmatprep.subr.bf16.mxu0 0
    %311 = vmatpush1.bf16.xpose.msra.mxu0 0
    %312 = vmatprep.mubr.bf16.mxu0 0
    %313 = vmatmul.mubr.bf16.gmra.mrb[0].mxu0 %v275
    %v314 = vpop.f32.mrb[0].mxu0
    %v315 = vadd.f32 0.0, %v314
    %v316 = vpop.f32.mrb[0].mxu0
    %v317 = vpop.f32.mrb[0].mxu0
    %v318 = vadd.f32 0.0, %v317
    %v319 = vpop.f32.mrb[0].mxu0
    %320 = vdwg.mxu0
    %322 = vrot.lane.b32.xlu0 %v268, 96
    %v323 = vpop.permute.xlu0 %322
    %325 = vrot.lane.b32.xlu0 %v270, 96
    %v326 = vpop.permute.xlu0 %325
    %v328 = vsel %vm135, %v323, 0
    %v331 = vsel %vm135, %v326, 0
    %333 = vmatprep.subr.bf16.mxu0 0
    %334 = vmatpush1.bf16.xpose.msra.mxu0 %v331
    %335 = vmatprep.subr.bf16.mxu0 0
    %336 = vmatpush1.bf16.xpose.msra.mxu0 0
    %337 = vmatprep.subr.bf16.mxu0 0
    %338 = vmatpush1.bf16.xpose.msra.mxu0 0
    %339 = vmatprep.subr.bf16.mxu0 0
    %340 = vmatpush1.bf16.xpose.msra.mxu0 0
    %341 = vmatprep.subr.bf16.mxu0 0
    %342 = vmatpush1.bf16.xpose.msra.mxu0 0
    %343 = vmatprep.subr.bf16.mxu0 0
    %344 = vmatpush1.bf16.xpose.msra.mxu0 0
    %345 = vmatprep.subr.bf16.mxu0 0
    %346 = vmatpush1.bf16.xpose.msra.mxu0 0
    %347 = vmatprep.subr.bf16.mxu0 0
    %348 = vmatpush1.bf16.xpose.msra.mxu0 0
    %349 = vmatprep.subr.bf16.mxu0 0
    %350 = vmatpush1.bf16.xpose.msra.mxu0 0
    %351 = vmatprep.subr.bf16.mxu0 0
    %352 = vmatpush1.bf16.xpose.msra.mxu0 0
    %353 = vmatprep.subr.bf16.mxu0 0
    %354 = vmatpush1.bf16.xpose.msra.mxu0 0
    %355 = vmatprep.subr.bf16.mxu0 0
    %356 = vmatpush1.bf16.xpose.msra.mxu0 0
    %357 = vmatprep.subr.bf16.mxu0 0
    %358 = vmatpush1.bf16.xpose.msra.mxu0 0
    %359 = vmatprep.subr.bf16.mxu0 0
    %360 = vmatpush1.bf16.xpose.msra.mxu0 0
    %361 = vmatprep.subr.bf16.mxu0 0
    %362 = vmatpush1.bf16.xpose.msra.mxu0 0
    %363 = vmatprep.subr.bf16.mxu0 0
    %364 = vmatpush1.bf16.xpose.msra.mxu0 0
    %365 = vmatprep.mubr.bf16.mxu0 0
    %366 = vmatmul.mubr.bf16.gmra.mrb[0].mxu0 %v328
    %v367 = vpop.f32.mrb[0].mxu0
    %v368 = vadd.f32 0.0, %v367
    %v369 = vpop.f32.mrb[0].mxu0
    %v370 = vpop.f32.mrb[0].mxu0
    %v371 = vadd.f32 0.0, %v370
    %v372 = vpop.f32.mrb[0].mxu0
    %373 = vdwg.mxu0
    %374 = vrot.lane.b32.xlu0 %v268, 64
    %v375 = vpop.permute.xlu0 %374
    %376 = vrot.lane.b32.xlu0 %v270, 64
    %v377 = vpop.permute.xlu0 %376
    %v379 = vsel %vm135, %v375, 0
    %v382 = vsel %vm135, %v377, 0
    %384 = vmatprep.subr.bf16.mxu0 0
    %385 = vmatpush1.bf16.xpose.msra.mxu0 %v382
    %386 = vmatprep.subr.bf16.mxu0 0
    %387 = vmatpush1.bf16.xpose.msra.mxu0 0
    %388 = vmatprep.subr.bf16.mxu0 0
    %389 = vmatpush1.bf16.xpose.msra.mxu0 0
    %390 = vmatprep.subr.bf16.mxu0 0
    %391 = vmatpush1.bf16.xpose.msra.mxu0 0
    %392 = vmatprep.subr.bf16.mxu0 0
    %393 = vmatpush1.bf16.xpose.msra.mxu0 0
    %394 = vmatprep.subr.bf16.mxu0 0
    %395 = vmatpush1.bf16.xpose.msra.mxu0 0
    %396 = vmatprep.subr.bf16.mxu0 0
    %397 = vmatpush1.bf16.xpose.msra.mxu0 0
    %398 = vmatprep.subr.bf16.mxu0 0
    %399 = vmatpush1.bf16.xpose.msra.mxu0 0
    %400 = vmatprep.subr.bf16.mxu0 0
    %401 = vmatpush1.bf16.xpose.msra.mxu0 0
    %402 = vmatprep.subr.bf16.mxu0 0
    %403 = vmatpush1.bf16.xpose.msra.mxu0 0
    %404 = vmatprep.subr.bf16.mxu0 0
    %405 = vmatpush1.bf16.xpose.msra.mxu0 0
    %406 = vmatprep.subr.bf16.mxu0 0
    %407 = vmatpush1.bf16.xpose.msra.mxu0 0
    %408 = vmatprep.subr.bf16.mxu0 0
    %409 = vmatpush1.bf16.xpose.msra.mxu0 0
    %410 = vmatprep.subr.bf16.mxu0 0
    %411 = vmatpush1.bf16.xpose.msra.mxu0 0
    %412 = vmatprep.subr.bf16.mxu0 0
    %413 = vmatpush1.bf16.xpose.msra.mxu0 0
    %414 = vmatprep.subr.bf16.mxu0 0
    %415 = vmatpush1.bf16.xpose.msra.mxu0 0
    %416 = vmatprep.mubr.bf16.mxu0 0
    %417 = vmatmul.mubr.bf16.gmra.mrb[0].mxu0 %v379
    %v418 = vpop.f32.mrb[0].mxu0
    %v419 = vadd.f32 0.0, %v418
    %v420 = vpop.f32.mrb[0].mxu0
    %v421 = vpop.f32.mrb[0].mxu0
    %v422 = vadd.f32 0.0, %v421
    %v423 = vpop.f32.mrb[0].mxu0
    %424 = vdwg.mxu0
    %425 = vrot.lane.b32.xlu0 %v268, 32
    %v426 = vpop.permute.xlu0 %425
    %427 = vrot.lane.b32.xlu0 %v270, 32
    %v428 = vpop.permute.xlu0 %427
    %v430 = vsel %vm135, %v426, 0
    %v433 = vsel %vm135, %v428, 0
    %435 = vmatprep.subr.bf16.mxu0 0
    %436 = vmatpush1.bf16.xpose.msra.mxu0 %v433
    %437 = vmatprep.subr.bf16.mxu0 0
    %438 = vmatpush1.bf16.xpose.msra.mxu0 0
    %439 = vmatprep.subr.bf16.mxu0 0
    %440 = vmatpush1.bf16.xpose.msra.mxu0 0
    %441 = vmatprep.subr.bf16.mxu0 0
    %442 = vmatpush1.bf16.xpose.msra.mxu0 0
    %443 = vmatprep.subr.bf16.mxu0 0
    %444 = vmatpush1.bf16.xpose.msra.mxu0 0
    %445 = vmatprep.subr.bf16.mxu0 0
    %446 = vmatpush1.bf16.xpose.msra.mxu0 0
    %447 = vmatprep.subr.bf16.mxu0 0
    %448 = vmatpush1.bf16.xpose.msra.mxu0 0
    %449 = vmatprep.subr.bf16.mxu0 0
    %450 = vmatpush1.bf16.xpose.msra.mxu0 0
    %451 = vmatprep.subr.bf16.mxu0 0
    %452 = vmatpush1.bf16.xpose.msra.mxu0 0
    %453 = vmatprep.subr.bf16.mxu0 0
    %454 = vmatpush1.bf16.xpose.msra.mxu0 0
    %455 = vmatprep.subr.bf16.mxu0 0
    %456 = vmatpush1.bf16.xpose.msra.mxu0 0
    %457 = vmatprep.subr.bf16.mxu0 0
    %458 = vmatpush1.bf16.xpose.msra.mxu0 0
    %459 = vmatprep.subr.bf16.mxu0 0
    %460 = vmatpush1.bf16.xpose.msra.mxu0 0
    %461 = vmatprep.subr.bf16.mxu0 0
    %462 = vmatpush1.bf16.xpose.msra.mxu0 0
    %463 = vmatprep.subr.bf16.mxu0 0
    %464 = vmatpush1.bf16.xpose.msra.mxu0 0
    %465 = vmatprep.subr.bf16.mxu0 0
    %466 = vmatpush1.bf16.xpose.msra.mxu0 0
    %467 = vmatprep.mubr.bf16.mxu0 0
    %468 = vmatmul.mubr.bf16.gmra.mrb[0].mxu0 %v430
    %v469 = vpop.f32.mrb[0].mxu0
    %v470 = vadd.f32 0.0, %v469
    %v471 = vpop.f32.mrb[0].mxu0
    %v472 = vpop.f32.mrb[0].mxu0
    %v473 = vadd.f32 0.0, %v472
    %v474 = vpop.f32.mrb[0].mxu0
    %475 = vdwg.mxu0
    %v477 = vsel %vm135, %v269, 0
    %v480 = vsel %vm135, %v271, 0
    %482 = vmatprep.subr.bf16.mxu0 0
    %483 = vmatpush1.bf16.xpose.msra.mxu0 %v480
    %484 = vmatprep.subr.bf16.mxu0 0
    %485 = vmatpush1.bf16.xpose.msra.mxu0 0
    %486 = vmatprep.subr.bf16.mxu0 0
    %487 = vmatpush1.bf16.xpose.msra.mxu0 0
    %488 = vmatprep.subr.bf16.mxu0 0
    %489 = vmatpush1.bf16.xpose.msra.mxu0 0
    %490 = vmatprep.subr.bf16.mxu0 0
    %491 = vmatpush1.bf16.xpose.msra.mxu0 0
    %492 = vmatprep.subr.bf16.mxu0 0
    %493 = vmatpush1.bf16.xpose.msra.mxu0 0
    %494 = vmatprep.subr.bf16.mxu0 0
    %495 = vmatpush1.bf16.xpose.msra.mxu0 0
    %496 = vmatprep.subr.bf16.mxu0 0
    %497 = vmatpush1.bf16.xpose.msra.mxu0 0
    %498 = vmatprep.subr.bf16.mxu0 0
    %499 = vmatpush1.bf16.xpose.msra.mxu0 0
    %500 = vmatprep.subr.bf16.mxu0 0
    %501 = vmatpush1.bf16.xpose.msra.mxu0 0
    %502 = vmatprep.subr.bf16.mxu0 0
    %503 = vmatpush1.bf16.xpose.msra.mxu0 0
    %504 = vmatprep.subr.bf16.mxu0 0
    %505 = vmatpush1.bf16.xpose.msra.mxu0 0
    %506 = vmatprep.subr.bf16.mxu0 0
    %507 = vmatpush1.bf16.xpose.msra.mxu0 0
    %508 = vmatprep.subr.bf16.mxu0 0
    %509 = vmatpush1.bf16.xpose.msra.mxu0 0
    %510 = vmatprep.subr.bf16.mxu0 0
    %511 = vmatpush1.bf16.xpose.msra.mxu0 0
    %512 = vmatprep.subr.bf16.mxu0 0
    %513 = vmatpush1.bf16.xpose.msra.mxu0 0
    %514 = vmatprep.mubr.bf16.mxu0 0
    %515 = vmatmul.mubr.bf16.gmra.mrb[0].mxu0 %v477
    %v516 = vpop.f32.mrb[0].mxu0
    %v517 = vadd.f32 0.0, %v516
    %v518 = vpop.f32.mrb[0].mxu0
    %v519 = vpop.f32.mrb[0].mxu0
    %v520 = vadd.f32 0.0, %v519
    %v521 = vpop.f32.mrb[0].mxu0
    %522 = vdwg.mxu0
    %524 = vrot.lane.b32.xlu0 %v269, 96
    %v525 = vpop.permute.xlu0 %524
    %527 = vrot.lane.b32.xlu0 %v271, 96
    %v528 = vpop.permute.xlu0 %527
    %v530 = vsel %vm135, %v525, 0
    %v533 = vsel %vm135, %v528, 0
    %535 = vmatprep.subr.bf16.mxu0 0
    %536 = vmatpush1.bf16.xpose.msra.mxu0 %v533
    %537 = vmatprep.subr.bf16.mxu0 0
    %538 = vmatpush1.bf16.xpose.msra.mxu0 0
    %539 = vmatprep.subr.bf16.mxu0 0
    %540 = vmatpush1.bf16.xpose.msra.mxu0 0
    %541 = vmatprep.subr.bf16.mxu0 0
    %542 = vmatpush1.bf16.xpose.msra.mxu0 0
    %543 = vmatprep.subr.bf16.mxu0 0
    %544 = vmatpush1.bf16.xpose.msra.mxu0 0
    %545 = vmatprep.subr.bf16.mxu0 0
    %546 = vmatpush1.bf16.xpose.msra.mxu0 0
    %547 = vmatprep.subr.bf16.mxu0 0
    %548 = vmatpush1.bf16.xpose.msra.mxu0 0
    %549 = vmatprep.subr.bf16.mxu0 0
    %550 = vmatpush1.bf16.xpose.msra.mxu0 0
    %551 = vmatprep.subr.bf16.mxu0 0
    %552 = vmatpush1.bf16.xpose.msra.mxu0 0
    %553 = vmatprep.subr.bf16.mxu0 0
    %554 = vmatpush1.bf16.xpose.msra.mxu0 0
    %555 = vmatprep.subr.bf16.mxu0 0
    %556 = vmatpush1.bf16.xpose.msra.mxu0 0
    %557 = vmatprep.subr.bf16.mxu0 0
    %558 = vmatpush1.bf16.xpose.msra.mxu0 0
    %559 = vmatprep.subr.bf16.mxu0 0
    %560 = vmatpush1.bf16.xpose.msra.mxu0 0
    %561 = vmatprep.subr.bf16.mxu0 0
    %562 = vmatpush1.bf16.xpose.msra.mxu0 0
    %563 = vmatprep.subr.bf16.mxu0 0
    %564 = vmatpush1.bf16.xpose.msra.mxu0 0
    %565 = vmatprep.subr.bf16.mxu0 0
    %566 = vmatpush1.bf16.xpose.msra.mxu0 0
    %567 = vmatprep.mubr.bf16.mxu0 0
    %568 = vmatmul.mubr.bf16.gmra.mrb[0].mxu0 %v530
    %v569 = vpop.f32.mrb[0].mxu0
    %v570 = vadd.f32 0.0, %v569
    %v571 = vpop.f32.mrb[0].mxu0
    %v572 = vpop.f32.mrb[0].mxu0
    %v573 = vadd.f32 0.0, %v572
    %v574 = vpop.f32.mrb[0].mxu0
    %575 = vdwg.mxu0
    %576 = vrot.lane.b32.xlu0 %v269, 64
    %v577 = vpop.permute.xlu0 %576
    %578 = vrot.lane.b32.xlu0 %v271, 64
    %v579 = vpop.permute.xlu0 %578
    %v581 = vsel %vm135, %v577, 0
    %v584 = vsel %vm135, %v579, 0
    %586 = vmatprep.subr.bf16.mxu0 0
    %587 = vmatpush1.bf16.xpose.msra.mxu0 %v584
    %588 = vmatprep.subr.bf16.mxu0 0
    %589 = vmatpush1.bf16.xpose.msra.mxu0 0
    %590 = vmatprep.subr.bf16.mxu0 0
    %591 = vmatpush1.bf16.xpose.msra.mxu0 0
    %592 = vmatprep.subr.bf16.mxu0 0
    %593 = vmatpush1.bf16.xpose.msra.mxu0 0
    %594 = vmatprep.subr.bf16.mxu0 0
    %595 = vmatpush1.bf16.xpose.msra.mxu0 0
    %596 = vmatprep.subr.bf16.mxu0 0
    %597 = vmatpush1.bf16.xpose.msra.mxu0 0
    %598 = vmatprep.subr.bf16.mxu0 0
    %599 = vmatpush1.bf16.xpose.msra.mxu0 0
    %600 = vmatprep.subr.bf16.mxu0 0
    %601 = vmatpush1.bf16.xpose.msra.mxu0 0
    %602 = vmatprep.subr.bf16.mxu0 0
    %603 = vmatpush1.bf16.xpose.msra.mxu0 0
    %604 = vmatprep.subr.bf16.mxu0 0
    %605 = vmatpush1.bf16.xpose.msra.mxu0 0
    %606 = vmatprep.subr.bf16.mxu0 0
    %607 = vmatpush1.bf16.xpose.msra.mxu0 0
    %608 = vmatprep.subr.bf16.mxu0 0
    %609 = vmatpush1.bf16.xpose.msra.mxu0 0
    %610 = vmatprep.subr.bf16.mxu0 0
    %611 = vmatpush1.bf16.xpose.msra.mxu0 0
    %612 = vmatprep.subr.bf16.mxu0 0
    %613 = vmatpush1.bf16.xpose.msra.mxu0 0
    %614 = vmatprep.subr.bf16.mxu0 0
    %615 = vmatpush1.bf16.xpose.msra.mxu0 0
    %616 = vmatprep.subr.bf16.mxu0 0
    %617 = vmatpush1.bf16.xpose.msra.mxu0 0
    %618 = vmatprep.mubr.bf16.mxu0 0
    %619 = vmatmul.mubr.bf16.gmra.mrb[0].mxu0 %v581
    %v620 = vpop.f32.mrb[0].mxu0
    %v621 = vadd.f32 0.0, %v620
    %v622 = vpop.f32.mrb[0].mxu0
    %v623 = vpop.f32.mrb[0].mxu0
    %v624 = vadd.f32 0.0, %v623
    %v625 = vpop.f32.mrb[0].mxu0
    %626 = vdwg.mxu0
    %627 = vrot.lane.b32.xlu0 %v269, 32
    %v628 = vpop.permute.xlu0 %627
    %629 = vrot.lane.b32.xlu0 %v271, 32
    %v630 = vpop.permute.xlu0 %629
    %v632 = vsel %vm135, %v628, 0
    %v635 = vsel %vm135, %v630, 0
    %637 = vmatprep.subr.bf16.mxu0 0
    %638 = vmatpush1.bf16.xpose.msra.mxu0 %v635
    %639 = vmatprep.subr.bf16.mxu0 0
    %640 = vmatpush1.bf16.xpose.msra.mxu0 0
    %641 = vmatprep.subr.bf16.mxu0 0
    %642 = vmatpush1.bf16.xpose.msra.mxu0 0
    %643 = vmatprep.subr.bf16.mxu0 0
    %644 = vmatpush1.bf16.xpose.msra.mxu0 0
    %645 = vmatprep.subr.bf16.mxu0 0
    %646 = vmatpush1.bf16.xpose.msra.mxu0 0
    %647 = vmatprep.subr.bf16.mxu0 0
    %648 = vmatpush1.bf16.xpose.msra.mxu0 0
    %649 = vmatprep.subr.bf16.mxu0 0
    %650 = vmatpush1.bf16.xpose.msra.mxu0 0
    %651 = vmatprep.subr.bf16.mxu0 0
    %652 = vmatpush1.bf16.xpose.msra.mxu0 0
    %653 = vmatprep.subr.bf16.mxu0 0
    %654 = vmatpush1.bf16.xpose.msra.mxu0 0
    %655 = vmatprep.subr.bf16.mxu0 0
    %656 = vmatpush1.bf16.xpose.msra.mxu0 0
    %657 = vmatprep.subr.bf16.mxu0 0
    %658 = vmatpush1.bf16.xpose.msra.mxu0 0
    %659 = vmatprep.subr.bf16.mxu0 0
    %660 = vmatpush1.bf16.xpose.msra.mxu0 0
    %661 = vmatprep.subr.bf16.mxu0 0
    %662 = vmatpush1.bf16.xpose.msra.mxu0 0
    %663 = vmatprep.subr.bf16.mxu0 0
    %664 = vmatpush1.bf16.xpose.msra.mxu0 0
    %665 = vmatprep.subr.bf16.mxu0 0
    %666 = vmatpush1.bf16.xpose.msra.mxu0 0
    %667 = vmatprep.subr.bf16.mxu0 0
    %668 = vmatpush1.bf16.xpose.msra.mxu0 0
    %669 = vmatprep.mubr.bf16.mxu0 0
    %670 = vmatmul.mubr.bf16.gmra.mrb[0].mxu0 %v632
    %v671 = vpop.f32.mrb[0].mxu0
    %v672 = vadd.f32 0.0, %v671
    %v673 = vpop.f32.mrb[0].mxu0
    %v674 = vpop.f32.mrb[0].mxu0
    %v675 = vadd.f32 0.0, %v674
    %v676 = vpop.f32.mrb[0].mxu0
    %677 = vdwg.mxu0
    %680 = vrot.lane.b32.xlu0 %v368, 16
    %v681 = vpop.permute.xlu0 %680
    %682 = vrot.lane.b32.xlu0 %v371, 16
    %v683 = vpop.permute.xlu0 %682
    %688 = vrot.lane.b32.xlu0 %v419, 32
    %v689 = vpop.permute.xlu0 %688
    %690 = vrot.lane.b32.xlu0 %v422, 32
    %v691 = vpop.permute.xlu0 %690
    %696 = vrot.lane.b32.xlu0 %v470, 48
    %v697 = vpop.permute.xlu0 %696
    %698 = vrot.lane.b32.xlu0 %v473, 48
    %v699 = vpop.permute.xlu0 %698
    %704 = vrot.lane.b32.xlu0 %v517, 64
    %v705 = vpop.permute.xlu0 %704
    %706 = vrot.lane.b32.xlu0 %v520, 64
    %v707 = vpop.permute.xlu0 %706
    %712 = vrot.lane.b32.xlu0 %v570, 80
    %v713 = vpop.permute.xlu0 %712
    %714 = vrot.lane.b32.xlu0 %v573, 80
    %v715 = vpop.permute.xlu0 %714
    %720 = vrot.lane.b32.xlu0 %v621, 96
    %v721 = vpop.permute.xlu0 %720
    %722 = vrot.lane.b32.xlu0 %v624, 96
    %v723 = vpop.permute.xlu0 %722
    %728 = vrot.lane.b32.xlu0 %v672, 112
    %v729 = vpop.permute.xlu0 %728
    %730 = vrot.lane.b32.xlu0 %v675, 112
    %v731 = vpop.permute.xlu0 %730
    %vm734 = vcmask 130048
    %v735 = vsel %vm734, %v315, %v681
    %v736 = vsel %vm734, %v318, %v683
    %v737 = vsel %vm135, %v735, %v689
    %v738 = vsel %vm135, %v736, %v691
    %vm739 = vcmask 392192
    %v740 = vsel %vm739, %v737, %v697
    %v741 = vsel %vm739, %v738, %v699
    %vm742 = vcmask 523264
    %v743 = vsel %vm742, %v740, %v705
    %v744 = vsel %vm742, %v741, %v707
    %vm745 = vcmask 654336
    %v746 = vsel %vm745, %v743, %v713
    %v747 = vsel %vm745, %v744, %v715
    %vm748 = vcmask 785408
    %v749 = vsel %vm748, %v746, %v721
    %v750 = vsel %vm748, %v747, %v723
    %vm751 = vcmask 916480
    %v752 = vsel %vm751, %v749, %v729
    %v753 = vsel %vm751, %v750, %v731
    %v754 = vld [vmem:[%s5] sm:$0xff]
    %v755 = vld [vmem:[%s5 + $0x8] sm:$0xff]
    %v756 = vadd.f32 %v752, %v754
    %v757 = vadd.f32 %v753, %v755
    %758 = vmax.xlane.f32.xlu0 %v756
    %v759 = vpop.xlane.xlu0 %758
    %760 = vmax.xlane.f32.xlu0 %v757
    %v761 = vpop.xlane.xlu0 %760
    %v762 = vsub.f32 %v756, %v759
    %v763 = vsub.f32 %v757, %v761
    %v764 = vmul.f32 %v762, 1.442695
    %v765 = vpow.pop %v764
    %v766 = vmul.f32 %v763, 1.442695
    %v767 = vpow.pop %v766
    %v768 = vld [vmem:[%s6] sm:$0xff]
    %v769 = vld [vmem:[%s6 + $0x8] sm:$0xff]
    %v770 = vld [vmem:[%s6 + $0x10] sm:$0xff]
    %v771 = vld [vmem:[%s6 + $0x18] sm:$0xff]
    %v772 = vld [vmem:[%s6 + $0x20] sm:$0xff]
    %v773 = vld [vmem:[%s6 + $0x28] sm:$0xff]
    %v774 = vld [vmem:[%s6 + $0x30] sm:$0xff]
    %v775 = vld [vmem:[%s6 + $0x38] sm:$0xff]
    %v776 = vld [vmem:[%s6 + $0x40] sm:$0xff]
    %v777 = vld [vmem:[%s6 + $0x48] sm:$0xff]
    %v778 = vld [vmem:[%s6 + $0x50] sm:$0xff]
    %v779 = vld [vmem:[%s6 + $0x58] sm:$0xff]
    %v780 = vld [vmem:[%s6 + $0x60] sm:$0xff]
    %v781 = vld [vmem:[%s6 + $0x68] sm:$0xff]
    %v782 = vld [vmem:[%s6 + $0x70] sm:$0xff]
    %v783 = vld [vmem:[%s6 + $0x78] sm:$0xff]
    %784 = vmatprep.subr.mxu0 0.0
    %785 = vmatpush1.msra.mxu0 %v768
    %786 = vmatprep.subr.mxu0 0.0
    %787 = vmatpush1.msra.mxu0 %v769
    %788 = vmatprep.subr.mxu0 0.0
    %789 = vmatpush1.msra.mxu0 %v770
    %790 = vmatprep.subr.mxu0 0.0
    %791 = vmatpush1.msra.mxu0 %v771
    %792 = vmatprep.subr.mxu0 0.0
    %793 = vmatpush1.msra.mxu0 %v772
    %794 = vmatprep.subr.mxu0 0.0
    %795 = vmatpush1.msra.mxu0 %v773
    %796 = vmatprep.subr.mxu0 0.0
    %797 = vmatpush1.msra.mxu0 %v774
    %798 = vmatprep.subr.mxu0 0.0
    %799 = vmatpush1.msra.mxu0 %v775
    %800 = vmatprep.subr.mxu0 0.0
    %801 = vmatpush1.msra.mxu0 %v776
    %802 = vmatprep.subr.mxu0 0.0
    %803 = vmatpush1.msra.mxu0 %v777
    %804 = vmatprep.subr.mxu0 0.0
    %805 = vmatpush1.msra.mxu0 %v778
    %806 = vmatprep.subr.mxu0 0.0
    %807 = vmatpush1.msra.mxu0 %v779
    %808 = vmatprep.subr.mxu0 0.0
    %809 = vmatpush1.msra.mxu0 %v780
    %810 = vmatprep.subr.mxu0 0.0
    %811 = vmatpush1.msra.mxu0 %v781
    %812 = vmatprep.subr.mxu0 0.0
    %813 = vmatpush1.msra.mxu0 %v782
    %814 = vmatprep.subr.mxu0 0.0
    %815 = vmatpush1.msra.mxu0 %v783
    %816 = vmatprep.subr.mxu0 0.0
    %817 = vmatpush1.msra.mxu0 0.0
    %818 = vmatprep.subr.mxu0 0.0
    %819 = vmatpush1.msra.mxu0 0.0
    %820 = vmatprep.subr.mxu0 0.0
    %821 = vmatpush1.msra.mxu0 0.0
    %822 = vmatprep.subr.mxu0 0.0
    %823 = vmatpush1.msra.mxu0 0.0
    %824 = vmatprep.subr.mxu0 0.0
    %825 = vmatpush1.msra.mxu0 0.0
    %826 = vmatprep.subr.mxu0 0.0
    %827 = vmatpush1.msra.mxu0 0.0
    %828 = vmatprep.subr.mxu0 0.0
    %829 = vmatpush1.msra.mxu0 0.0
    %830 = vmatprep.subr.mxu0 0.0
    %831 = vmatpush1.msra.mxu0 0.0
    %832 = vmatprep.subr.mxu0 0.0
    %833 = vmatpush1.msra.mxu0 0.0
    %834 = vmatprep.subr.mxu0 0.0
    %835 = vmatpush1.msra.mxu0 0.0
    %836 = vmatprep.subr.mxu0 0.0
    %837 = vmatpush1.msra.mxu0 0.0
    %838 = vmatprep.subr.mxu0 0.0
    %839 = vmatpush1.msra.mxu0 0.0
    %840 = vmatprep.subr.mxu0 0.0
    %841 = vmatpush1.msra.mxu0 0.0
    %842 = vmatprep.subr.mxu0 0.0
    %843 = vmatpush1.msra.mxu0 0.0
    %844 = vmatprep.subr.mxu0 0.0
    %845 = vmatpush1.msra.mxu0 0.0
    %846 = vmatprep.subr.mxu0 0.0
    %847 = vmatpush1.msra.mxu0 0.0
    %848 = vmatprep.mubr.f32.mxu0 0.0
    %849 = vmatmul.mubr.f32.gmra.mrb[0].mxu0 %v765
    %v850 = vpop.f32.mrb[0].mxu0
    %v851 = vadd.f32 0.0, %v850
    %v852 = vpop.f32.mrb[0].mxu0
    %853 = vmatprep.mubr.f32.mxu0 0.0
    %854 = vmatmul.mubr.f32.gmra.mrb[0].mxu0 %v767
    %v855 = vpop.f32.mrb[0].mxu0
    %v856 = vadd.f32 0.0, %v855
    %v857 = vpop.f32.mrb[0].mxu0
    %858 = vdwg.mxu0
    %v859 = vrcp.pop %v851
    %v860 = vrcp.pop %v856
    %v861 = vmul.f32 %v765, %v859
    %v862 = vmul.f32 %v767, %v860
    %v863 = vpack.c.bf16 %v862, %v861
    %v865 = vsel %vm734, %v863, 0
    %867 = vmatprep.subr.bf16.mxu0 0
    %868 = vmatpush1.bf16.msra.mxu0 %v272
    %869 = vmatprep.subr.bf16.mxu0 0
    %870 = vmatpush1.bf16.msra.mxu0 0
    %871 = vmatprep.subr.bf16.mxu0 0
    %872 = vmatpush1.bf16.msra.mxu0 0
    %873 = vmatprep.subr.bf16.mxu0 0
    %874 = vmatpush1.bf16.msra.mxu0 0
    %875 = vmatprep.subr.bf16.mxu0 0
    %876 = vmatpush1.bf16.msra.mxu0 0
    %877 = vmatprep.subr.bf16.mxu0 0
    %878 = vmatpush1.bf16.msra.mxu0 0
    %879 = vmatprep.subr.bf16.mxu0 0
    %880 = vmatpush1.bf16.msra.mxu0 0
    %881 = vmatprep.subr.bf16.mxu0 0
    %882 = vmatpush1.bf16.msra.mxu0 0
    %883 = vmatprep.subr.bf16.mxu0 0
    %884 = vmatpush1.bf16.msra.mxu0 0
    %885 = vmatprep.subr.bf16.mxu0 0
    %886 = vmatpush1.bf16.msra.mxu0 0
    %887 = vmatprep.subr.bf16.mxu0 0
    %888 = vmatpush1.bf16.msra.mxu0 0
    %889 = vmatprep.subr.bf16.mxu0 0
    %890 = vmatpush1.bf16.msra.mxu0 0
    %891 = vmatprep.subr.bf16.mxu0 0
    %892 = vmatpush1.bf16.msra.mxu0 0
    %893 = vmatprep.subr.bf16.mxu0 0
    %894 = vmatpush1.bf16.msra.mxu0 0
    %895 = vmatprep.subr.bf16.mxu0 0
    %896 = vmatpush1.bf16.msra.mxu0 0
    %897 = vmatprep.subr.bf16.mxu0 0
    %898 = vmatpush1.bf16.msra.mxu0 0
    %899 = vmatprep.mubr.bf16.mxu0 0
    %900 = vmatmul.mubr.bf16.gmra.mrb[0].mxu0 %v865
    %v901 = vpop.f32.mrb[0].mxu0
    %v902 = vadd.f32 0.0, %v901
    %v903 = vpop.f32.mrb[0].mxu0
    %v904 = vpop.f32.mrb[0].mxu0
    %v905 = vadd.f32 0.0, %v904
    %v906 = vpop.f32.mrb[0].mxu0
    %907 = vdwg.mxu0
    %909 = vrot.lane.b32.xlu0 %v863, 112
    %v910 = vpop.permute.xlu0 %909
    %912 = vrot.lane.b32.xlu0 %v272, 96
    %v913 = vpop.permute.xlu0 %912
    %v916 = vsel %vm734, %v910, 0
    %918 = vmatprep.subr.bf16.mxu0 0
    %919 = vmatpush1.bf16.msra.mxu0 %v913
    %920 = vmatprep.subr.bf16.mxu0 0
    %921 = vmatpush1.bf16.msra.mxu0 0
    %922 = vmatprep.subr.bf16.mxu0 0
    %923 = vmatpush1.bf16.msra.mxu0 0
    %924 = vmatprep.subr.bf16.mxu0 0
    %925 = vmatpush1.bf16.msra.mxu0 0
    %926 = vmatprep.subr.bf16.mxu0 0
    %927 = vmatpush1.bf16.msra.mxu0 0
    %928 = vmatprep.subr.bf16.mxu0 0
    %929 = vmatpush1.bf16.msra.mxu0 0
    %930 = vmatprep.subr.bf16.mxu0 0
    %931 = vmatpush1.bf16.msra.mxu0 0
    %932 = vmatprep.subr.bf16.mxu0 0
    %933 = vmatpush1.bf16.msra.mxu0 0
    %934 = vmatprep.subr.bf16.mxu0 0
    %935 = vmatpush1.bf16.msra.mxu0 0
    %936 = vmatprep.subr.bf16.mxu0 0
    %937 = vmatpush1.bf16.msra.mxu0 0
    %938 = vmatprep.subr.bf16.mxu0 0
    %939 = vmatpush1.bf16.msra.mxu0 0
    %940 = vmatprep.subr.bf16.mxu0 0
    %941 = vmatpush1.bf16.msra.mxu0 0
    %942 = vmatprep.subr.bf16.mxu0 0
    %943 = vmatpush1.bf16.msra.mxu0 0
    %944 = vmatprep.subr.bf16.mxu0 0
    %945 = vmatpush1.bf16.msra.mxu0 0
    %946 = vmatprep.subr.bf16.mxu0 0
    %947 = vmatpush1.bf16.msra.mxu0 0
    %948 = vmatprep.subr.bf16.mxu0 0
    %949 = vmatpush1.bf16.msra.mxu0 0
    %950 = vmatprep.mubr.bf16.mxu0 0
    %951 = vmatmul.mubr.bf16.gmra.mrb[0].mxu0 %v916
    %v952 = vpop.f32.mrb[0].mxu0
    %v953 = vadd.f32 0.0, %v952
    %v954 = vpop.f32.mrb[0].mxu0
    %v955 = vpop.f32.mrb[0].mxu0
    %v956 = vadd.f32 0.0, %v955
    %v957 = vpop.f32.mrb[0].mxu0
    %958 = vdwg.mxu0
    %959 = vrot.lane.b32.xlu0 %v863, 96
    %v960 = vpop.permute.xlu0 %959
    %961 = vrot.lane.b32.xlu0 %v272, 64
    %v962 = vpop.permute.xlu0 %961
    %v965 = vsel %vm734, %v960, 0
    %967 = vmatprep.subr.bf16.mxu0 0
    %968 = vmatpush1.bf16.msra.mxu0 %v962
    %969 = vmatprep.subr.bf16.mxu0 0
    %970 = vmatpush1.bf16.msra.mxu0 0
    %971 = vmatprep.subr.bf16.mxu0 0
    %972 = vmatpush1.bf16.msra.mxu0 0
    %973 = vmatprep.subr.bf16.mxu0 0
    %974 = vmatpush1.bf16.msra.mxu0 0
    %975 = vmatprep.subr.bf16.mxu0 0
    %976 = vmatpush1.bf16.msra.mxu0 0
    %977 = vmatprep.subr.bf16.mxu0 0
    %978 = vmatpush1.bf16.msra.mxu0 0
    %979 = vmatprep.subr.bf16.mxu0 0
    %980 = vmatpush1.bf16.msra.mxu0 0
    %981 = vmatprep.subr.bf16.mxu0 0
    %982 = vmatpush1.bf16.msra.mxu0 0
    %983 = vmatprep.subr.bf16.mxu0 0
    %984 = vmatpush1.bf16.msra.mxu0 0
    %985 = vmatprep.subr.bf16.mxu0 0
    %986 = vmatpush1.bf16.msra.mxu0 0
    %987 = vmatprep.subr.bf16.mxu0 0
    %988 = vmatpush1.bf16.msra.mxu0 0
    %989 = vmatprep.subr.bf16.mxu0 0
    %990 = vmatpush1.bf16.msra.mxu0 0
    %991 = vmatprep.subr.bf16.mxu0 0
    %992 = vmatpush1.bf16.msra.mxu0 0
    %993 = vmatprep.subr.bf16.mxu0 0
    %994 = vmatpush1.bf16.msra.mxu0 0
    %995 = vmatprep.subr.bf16.mxu0 0
    %996 = vmatpush1.bf16.msra.mxu0 0
    %997 = vmatprep.subr.bf16.mxu0 0
    %998 = vmatpush1.bf16.msra.mxu0 0
    %999 = vmatprep.mubr.bf16.mxu0 0
    %1000 = vmatmul.mubr.bf16.gmra.mrb[0].mxu0 %v965
    %v1001 = vpop.f32.mrb[0].mxu0
    %v1002 = vadd.f32 0.0, %v1001
    %v1003 = vpop.f32.mrb[0].mxu0
    %v1004 = vpop.f32.mrb[0].mxu0
    %v1005 = vadd.f32 0.0, %v1004
    %v1006 = vpop.f32.mrb[0].mxu0
    %1007 = vdwg.mxu0
    %1008 = vrot.lane.b32.xlu0 %v863, 80
    %v1009 = vpop.permute.xlu0 %1008
    %1010 = vrot.lane.b32.xlu0 %v272, 32
    %v1011 = vpop.permute.xlu0 %1010
    %v1014 = vsel %vm734, %v1009, 0
    %1016 = vmatprep.subr.bf16.mxu0 0
    %1017 = vmatpush1.bf16.msra.mxu0 %v1011
    %1018 = vmatprep.subr.bf16.mxu0 0
    %1019 = vmatpush1.bf16.msra.mxu0 0
    %1020 = vmatprep.subr.bf16.mxu0 0
    %1021 = vmatpush1.bf16.msra.mxu0 0
    %1022 = vmatprep.subr.bf16.mxu0 0
    %1023 = vmatpush1.bf16.msra.mxu0 0
    %1024 = vmatprep.subr.bf16.mxu0 0
    %1025 = vmatpush1.bf16.msra.mxu0 0
    %1026 = vmatprep.subr.bf16.mxu0 0
    %1027 = vmatpush1.bf16.msra.mxu0 0
    %1028 = vmatprep.subr.bf16.mxu0 0
    %1029 = vmatpush1.bf16.msra.mxu0 0
    %1030 = vmatprep.subr.bf16.mxu0 0
    %1031 = vmatpush1.bf16.msra.mxu0 0
    %1032 = vmatprep.subr.bf16.mxu0 0
    %1033 = vmatpush1.bf16.msra.mxu0 0
    %1034 = vmatprep.subr.bf16.mxu0 0
    %1035 = vmatpush1.bf16.msra.mxu0 0
    %1036 = vmatprep.subr.bf16.mxu0 0
    %1037 = vmatpush1.bf16.msra.mxu0 0
    %1038 = vmatprep.subr.bf16.mxu0 0
    %1039 = vmatpush1.bf16.msra.mxu0 0
    %1040 = vmatprep.subr.bf16.mxu0 0
    %1041 = vmatpush1.bf16.msra.mxu0 0
    %1042 = vmatprep.subr.bf16.mxu0 0
    %1043 = vmatpush1.bf16.msra.mxu0 0
    %1044 = vmatprep.subr.bf16.mxu0 0
    %1045 = vmatpush1.bf16.msra.mxu0 0
    %1046 = vmatprep.subr.bf16.mxu0 0
    %1047 = vmatpush1.bf16.msra.mxu0 0
    %1048 = vmatprep.mubr.bf16.mxu0 0
    %1049 = vmatmul.mubr.bf16.gmra.mrb[0].mxu0 %v1014
    %v1050 = vpop.f32.mrb[0].mxu0
    %v1051 = vadd.f32 0.0, %v1050
    %v1052 = vpop.f32.mrb[0].mxu0
    %v1053 = vpop.f32.mrb[0].mxu0
    %v1054 = vadd.f32 0.0, %v1053
    %v1055 = vpop.f32.mrb[0].mxu0
    %1056 = vdwg.mxu0
    %1057 = vrot.lane.b32.xlu0 %v863, 64
    %v1058 = vpop.permute.xlu0 %1057
    %v1060 = vsel %vm734, %v1058, 0
    %1062 = vmatprep.subr.bf16.mxu0 0
    %1063 = vmatpush1.bf16.msra.mxu0 %v273
    %1064 = vmatprep.subr.bf16.mxu0 0
    %1065 = vmatpush1.bf16.msra.mxu0 0
    %1066 = vmatprep.subr.bf16.mxu0 0
    %1067 = vmatpush1.bf16.msra.mxu0 0
    %1068 = vmatprep.subr.bf16.mxu0 0
    %1069 = vmatpush1.bf16.msra.mxu0 0
    %1070 = vmatprep.subr.bf16.mxu0 0
    %1071 = vmatpush1.bf16.msra.mxu0 0
    %1072 = vmatprep.subr.bf16.mxu0 0
    %1073 = vmatpush1.bf16.msra.mxu0 0
    %1074 = vmatprep.subr.bf16.mxu0 0
    %1075 = vmatpush1.bf16.msra.mxu0 0
    %1076 = vmatprep.subr.bf16.mxu0 0
    %1077 = vmatpush1.bf16.msra.mxu0 0
    %1078 = vmatprep.subr.bf16.mxu0 0
    %1079 = vmatpush1.bf16.msra.mxu0 0
    %1080 = vmatprep.subr.bf16.mxu0 0
    %1081 = vmatpush1.bf16.msra.mxu0 0
    %1082 = vmatprep.subr.bf16.mxu0 0
    %1083 = vmatpush1.bf16.msra.mxu0 0
    %1084 = vmatprep.subr.bf16.mxu0 0
    %1085 = vmatpush1.bf16.msra.mxu0 0
    %1086 = vmatprep.subr.bf16.mxu0 0
    %1087 = vmatpush1.bf16.msra.mxu0 0
    %1088 = vmatprep.subr.bf16.mxu0 0
    %1089 = vmatpush1.bf16.msra.mxu0 0
    %1090 = vmatprep.subr.bf16.mxu0 0
    %1091 = vmatpush1.bf16.msra.mxu0 0
    %1092 = vmatprep.subr.bf16.mxu0 0
    %1093 = vmatpush1.bf16.msra.mxu0 0
    %1094 = vmatprep.mubr.bf16.mxu0 0
    %1095 = vmatmul.mubr.bf16.gmra.mrb[0].mxu0 %v1060
    %v1096 = vpop.f32.mrb[0].mxu0
    %v1097 = vadd.f32 0.0, %v1096
    %v1098 = vpop.f32.mrb[0].mxu0
    %v1099 = vpop.f32.mrb[0].mxu0
    %v1100 = vadd.f32 0.0, %v1099
    %v1101 = vpop.f32.mrb[0].mxu0
    %1102 = vdwg.mxu0
    %1103 = vrot.lane.b32.xlu0 %v863, 48
    %v1104 = vpop.permute.xlu0 %1103
    %1106 = vrot.lane.b32.xlu0 %v273, 96
    %v1107 = vpop.permute.xlu0 %1106
    %v1110 = vsel %vm734, %v1104, 0
    %1112 = vmatprep.subr.bf16.mxu0 0
    %1113 = vmatpush1.bf16.msra.mxu0 %v1107
    %1114 = vmatprep.subr.bf16.mxu0 0
    %1115 = vmatpush1.bf16.msra.mxu0 0
    %1116 = vmatprep.subr.bf16.mxu0 0
    %1117 = vmatpush1.bf16.msra.mxu0 0
    %1118 = vmatprep.subr.bf16.mxu0 0
    %1119 = vmatpush1.bf16.msra.mxu0 0
    %1120 = vmatprep.subr.bf16.mxu0 0
    %1121 = vmatpush1.bf16.msra.mxu0 0
    %1122 = vmatprep.subr.bf16.mxu0 0
    %1123 = vmatpush1.bf16.msra.mxu0 0
    %1124 = vmatprep.subr.bf16.mxu0 0
    %1125 = vmatpush1.bf16.msra.mxu0 0
    %1126 = vmatprep.subr.bf16.mxu0 0
    %1127 = vmatpush1.bf16.msra.mxu0 0
    %1128 = vmatprep.subr.bf16.mxu0 0
    %1129 = vmatpush1.bf16.msra.mxu0 0
    %1130 = vmatprep.subr.bf16.mxu0 0
    %1131 = vmatpush1.bf16.msra.mxu0 0
    %1132 = vmatprep.subr.bf16.mxu0 0
    %1133 = vmatpush1.bf16.msra.mxu0 0
    %1134 = vmatprep.subr.bf16.mxu0 0
    %1135 = vmatpush1.bf16.msra.mxu0 0
    %1136 = vmatprep.subr.bf16.mxu0 0
    %1137 = vmatpush1.bf16.msra.mxu0 0
    %1138 = vmatprep.subr.bf16.mxu0 0
    %1139 = vmatpush1.bf16.msra.mxu0 0
    %1140 = vmatprep.subr.bf16.mxu0 0
    %1141 = vmatpush1.bf16.msra.mxu0 0
    %1142 = vmatprep.subr.bf16.mxu0 0
    %1143 = vmatpush1.bf16.msra.mxu0 0
    %1144 = vmatprep.mubr.bf16.mxu0 0
    %1145 = vmatmul.mubr.bf16.gmra.mrb[0].mxu0 %v1110
    %v1146 = vpop.f32.mrb[0].mxu0
    %v1147 = vadd.f32 0.0, %v1146
    %v1148 = vpop.f32.mrb[0].mxu0
    %v1149 = vpop.f32.mrb[0].mxu0
    %v1150 = vadd.f32 0.0, %v1149
    %v1151 = vpop.f32.mrb[0].mxu0
    %1152 = vdwg.mxu0
    %1153 = vrot.lane.b32.xlu0 %v863, 32
    %v1154 = vpop.permute.xlu0 %1153
    %1155 = vrot.lane.b32.xlu0 %v273, 64
    %v1156 = vpop.permute.xlu0 %1155
    %v1159 = vsel %vm734, %v1154, 0
    %1161 = vmatprep.subr.bf16.mxu0 0
    %1162 = vmatpush1.bf16.msra.mxu0 %v1156
    %1163 = vmatprep.subr.bf16.mxu0 0
    %1164 = vmatpush1.bf16.msra.mxu0 0
    %1165 = vmatprep.subr.bf16.mxu0 0
    %1166 = vmatpush1.bf16.msra.mxu0 0
    %1167 = vmatprep.subr.bf16.mxu0 0
    %1168 = vmatpush1.bf16.msra.mxu0 0
    %1169 = vmatprep.subr.bf16.mxu0 0
    %1170 = vmatpush1.bf16.msra.mxu0 0
    %1171 = vmatprep.subr.bf16.mxu0 0
    %1172 = vmatpush1.bf16.msra.mxu0 0
    %1173 = vmatprep.subr.bf16.mxu0 0
    %1174 = vmatpush1.bf16.msra.mxu0 0
    %1175 = vmatprep.subr.bf16.mxu0 0
    %1176 = vmatpush1.bf16.msra.mxu0 0
    %1177 = vmatprep.subr.bf16.mxu0 0
    %1178 = vmatpush1.bf16.msra.mxu0 0
    %1179 = vmatprep.subr.bf16.mxu0 0
    %1180 = vmatpush1.bf16.msra.mxu0 0
    %1181 = vmatprep.subr.bf16.mxu0 0
    %1182 = vmatpush1.bf16.msra.mxu0 0
    %1183 = vmatprep.subr.bf16.mxu0 0
    %1184 = vmatpush1.bf16.msra.mxu0 0
    %1185 = vmatprep.subr.bf16.mxu0 0
    %1186 = vmatpush1.bf16.msra.mxu0 0
    %1187 = vmatprep.subr.bf16.mxu0 0
    %1188 = vmatpush1.bf16.msra.mxu0 0
    %1189 = vmatprep.subr.bf16.mxu0 0
    %1190 = vmatpush1.bf16.msra.mxu0 0
    %1191 = vmatprep.subr.bf16.mxu0 0
    %1192 = vmatpush1.bf16.msra.mxu0 0
    %1193 = vmatprep.mubr.bf16.mxu0 0
    %1194 = vmatmul.mubr.bf16.gmra.mrb[0].mxu0 %v1159
    %v1195 = vpop.f32.mrb[0].mxu0
    %v1196 = vadd.f32 0.0, %v1195
    %v1197 = vpop.f32.mrb[0].mxu0
    %v1198 = vpop.f32.mrb[0].mxu0
    %v1199 = vadd.f32 0.0, %v1198
    %v1200 = vpop.f32.mrb[0].mxu0
    %1201 = vdwg.mxu0
    %1202 = vrot.lane.b32.xlu0 %v863, 16
    %v1203 = vpop.permute.xlu0 %1202
    %1204 = vrot.lane.b32.xlu0 %v273, 32
    %v1205 = vpop.permute.xlu0 %1204
    %v1208 = vsel %vm734, %v1203, 0
    %1210 = vmatprep.subr.bf16.mxu0 0
    %1211 = vmatpush1.bf16.msra.mxu0 %v1205
    %1212 = vmatprep.subr.bf16.mxu0 0
    %1213 = vmatpush1.bf16.msra.mxu0 0
    %1214 = vmatprep.subr.bf16.mxu0 0
    %1215 = vmatpush1.bf16.msra.mxu0 0
    %1216 = vmatprep.subr.bf16.mxu0 0
    %1217 = vmatpush1.bf16.msra.mxu0 0
    %1218 = vmatprep.subr.bf16.mxu0 0
    %1219 = vmatpush1.bf16.msra.mxu0 0
    %1220 = vmatprep.subr.bf16.mxu0 0
    %1221 = vmatpush1.bf16.msra.mxu0 0
    %1222 = vmatprep.subr.bf16.mxu0 0
    %1223 = vmatpush1.bf16.msra.mxu0 0
    %1224 = vmatprep.subr.bf16.mxu0 0
    %1225 = vmatpush1.bf16.msra.mxu0 0
    %1226 = vmatprep.subr.bf16.mxu0 0
    %1227 = vmatpush1.bf16.msra.mxu0 0
    %1228 = vmatprep.subr.bf16.mxu0 0
    %1229 = vmatpush1.bf16.msra.mxu0 0
    %1230 = vmatprep.subr.bf16.mxu0 0
    %1231 = vmatpush1.bf16.msra.mxu0 0
    %1232 = vmatprep.subr.bf16.mxu0 0
    %1233 = vmatpush1.bf16.msra.mxu0 0
    %1234 = vmatprep.subr.bf16.mxu0 0
    %1235 = vmatpush1.bf16.msra.mxu0 0
    %1236 = vmatprep.subr.bf16.mxu0 0
    %1237 = vmatpush1.bf16.msra.mxu0 0
    %1238 = vmatprep.subr.bf16.mxu0 0
    %1239 = vmatpush1.bf16.msra.mxu0 0
    %1240 = vmatprep.subr.bf16.mxu0 0
    %1241 = vmatpush1.bf16.msra.mxu0 0
    %1242 = vmatprep.mubr.bf16.mxu0 0
    %1243 = vmatmul.mubr.bf16.gmra.mrb[0].mxu0 %v1208
    %v1244 = vpop.f32.mrb[0].mxu0
    %v1245 = vadd.f32 0.0, %v1244
    %v1246 = vpop.f32.mrb[0].mxu0
    %v1247 = vpop.f32.mrb[0].mxu0
    %v1248 = vadd.f32 0.0, %v1247
    %v1249 = vpop.f32.mrb[0].mxu0
    %1250 = vdwg.mxu0
    %1253 = vrot.lane.b32.xlu0 %v953, 32
    %v1254 = vpop.permute.xlu0 %1253
    %1255 = vrot.lane.b32.xlu0 %v956, 32
    %v1256 = vpop.permute.xlu0 %1255
    %1261 = vrot.lane.b32.xlu0 %v1002, 64
    %v1262 = vpop.permute.xlu0 %1261
    %1263 = vrot.lane.b32.xlu0 %v1005, 64
    %v1264 = vpop.permute.xlu0 %1263
    %1269 = vrot.lane.b32.xlu0 %v1051, 96
    %v1270 = vpop.permute.xlu0 %1269
    %1271 = vrot.lane.b32.xlu0 %v1054, 96
    %v1272 = vpop.permute.xlu0 %1271
    %1277 = vrot.lane.b32.xlu0 %v1147, 32
    %v1278 = vpop.permute.xlu0 %1277
    %1279 = vrot.lane.b32.xlu0 %v1150, 32
    %v1280 = vpop.permute.xlu0 %1279
    %1285 = vrot.lane.b32.xlu0 %v1196, 64
    %v1286 = vpop.permute.xlu0 %1285
    %1287 = vrot.lane.b32.xlu0 %v1199, 64
    %v1288 = vpop.permute.xlu0 %1287
    %1293 = vrot.lane.b32.xlu0 %v1245, 96
    %v1294 = vpop.permute.xlu0 %1293
    %1295 = vrot.lane.b32.xlu0 %v1248, 96
    %v1296 = vpop.permute.xlu0 %1295
    %v1299 = vsel %vm135, %v902, %v1254
    %v1300 = vsel %vm135, %v905, %v1256
    %v1301 = vsel %vm742, %v1299, %v1262
    %v1302 = vsel %vm742, %v1300, %v1264
    %v1303 = vsel %vm748, %v1301, %v1270
    %v1304 = vsel %vm748, %v1302, %v1272
    %v1305 = vsel %vm135, %v1097, %v1278
    %v1306 = vsel %vm135, %v1100, %v1280
    %v1307 = vsel %vm742, %v1305, %v1286
    %v1308 = vsel %vm742, %v1306, %v1288
    %v1309 = vsel %vm748, %v1307, %v1294
    %v1310 = vsel %vm748, %v1308, %v1296
    %v1311 = vpack.c.bf16 %v1304, %v1303
    %v1312 = vpack.c.bf16 %v1310, %v1309
    %v1313 = vld [vmem:[%s3] sm:$0xf]
    %v1314 = vld [vmem:[%s3 + $0x4] sm:$0xf]
    %v1315 = vld [vmem:[%s3 + $0x8] sm:$0xf]
    %v1316 = vld [vmem:[%s3 + $0xc] sm:$0xf]
    %v1317 = vld [vmem:[%s3 + $0x10] sm:$0xf]
    %v1318 = vld [vmem:[%s3 + $0x14] sm:$0xf]
    %v1319 = vld [vmem:[%s3 + $0x18] sm:$0xf]
    %v1320 = vld [vmem:[%s3 + $0x1c] sm:$0xf]
    %v1321 = vld [vmem:[%s3 + $0x20] sm:$0xf]
    %v1322 = vld [vmem:[%s3 + $0x24] sm:$0xf]
    %v1323 = vld [vmem:[%s3 + $0x28] sm:$0xf]
    %v1324 = vld [vmem:[%s3 + $0x2c] sm:$0xf]
    %v1325 = vld [vmem:[%s3 + $0x30] sm:$0xf]
    %v1326 = vld [vmem:[%s3 + $0x34] sm:$0xf]
    %v1327 = vld [vmem:[%s3 + $0x38] sm:$0xf]
    %v1328 = vld [vmem:[%s3 + $0x3c] sm:$0xf]
    %v1329 = vld [vmem:[%s3 + $0x40] sm:$0xf]
    %v1330 = vld [vmem:[%s3 + $0x44] sm:$0xf]
    %v1331 = vld [vmem:[%s3 + $0x48] sm:$0xf]
    %v1332 = vld [vmem:[%s3 + $0x4c] sm:$0xf]
    %v1333 = vld [vmem:[%s3 + $0x50] sm:$0xf]
    %v1334 = vld [vmem:[%s3 + $0x54] sm:$0xf]
    %v1335 = vld [vmem:[%s3 + $0x58] sm:$0xf]
    %v1336 = vld [vmem:[%s3 + $0x5c] sm:$0xf]
    %v1337 = vld [vmem:[%s3 + $0x60] sm:$0xf]
    %v1338 = vld [vmem:[%s3 + $0x64] sm:$0xf]
    %v1339 = vld [vmem:[%s3 + $0x68] sm:$0xf]
    %v1340 = vld [vmem:[%s3 + $0x6c] sm:$0xf]
    %v1341 = vld [vmem:[%s3 + $0x70] sm:$0xf]
    %v1342 = vld [vmem:[%s3 + $0x74] sm:$0xf]
    %v1343 = vld [vmem:[%s3 + $0x78] sm:$0xf]
    %v1344 = vld [vmem:[%s3 + $0x7c] sm:$0xf]
    %v1345 = vld [vmem:[%s4] sm:$0x1]
    %v1347 = vlaneseq
    %v1348 = vshrl.u32 %v1347, 7
    %v1349 = vsub.s32 0, %v1348
    %v1350 = vrot.slane %v1345, %v1349
    %v1384 = vunpack.c.l.b16 %v1313
    %v1385 = vunpack.c.l.b16 %v1314
    %v1386 = vunpack.c.l.b16 %v1315
    %v1387 = vunpack.c.l.b16 %v1316
    %v1388 = vunpack.c.l.b16 %v1317
    %v1389 = vunpack.c.l.b16 %v1318
    %v1390 = vunpack.c.l.b16 %v1319
    %v1391 = vunpack.c.l.b16 %v1320
    %v1392 = vunpack.c.l.b16 %v1321
    %v1393 = vunpack.c.l.b16 %v1322
    %v1394 = vunpack.c.l.b16 %v1323
    %v1395 = vunpack.c.l.b16 %v1324
    %v1396 = vunpack.c.l.b16 %v1325
    %v1397 = vunpack.c.l.b16 %v1326
    %v1398 = vunpack.c.l.b16 %v1327
    %v1399 = vunpack.c.l.b16 %v1328
    %v1400 = vunpack.c.l.b16 %v1329
    %v1401 = vunpack.c.l.b16 %v1330
    %v1402 = vunpack.c.l.b16 %v1331
    %v1403 = vunpack.c.l.b16 %v1332
    %v1404 = vunpack.c.l.b16 %v1333
    %v1405 = vunpack.c.l.b16 %v1334
    %v1406 = vunpack.c.l.b16 %v1335
    %v1407 = vunpack.c.l.b16 %v1336
    %v1408 = vunpack.c.l.b16 %v1337
    %v1409 = vunpack.c.l.b16 %v1338
    %v1410 = vunpack.c.l.b16 %v1339
    %v1411 = vunpack.c.l.b16 %v1340
    %v1412 = vunpack.c.l.b16 %v1341
    %v1413 = vunpack.c.l.b16 %v1342
    %v1414 = vunpack.c.l.b16 %v1343
    %v1415 = vunpack.c.l.b16 %v1344
    %v1416 = vpack.c.b16 %v1385, %v1384
    %v1417 = vpack.c.b16 %v1387, %v1386
    %v1418 = vpack.c.b16 %v1389, %v1388
    %v1419 = vpack.c.b16 %v1391, %v1390
    %v1420 = vpack.c.b16 %v1393, %v1392
    %v1421 = vpack.c.b16 %v1395, %v1394
    %v1422 = vpack.c.b16 %v1397, %v1396
    %v1423 = vpack.c.b16 %v1399, %v1398
    %v1424 = vpack.c.b16 %v1401, %v1400
    %v1425 = vpack.c.b16 %v1403, %v1402
    %v1426 = vpack.c.b16 %v1405, %v1404
    %v1427 = vpack.c.b16 %v1407, %v1406
    %v1428 = vpack.c.b16 %v1409, %v1408
    %v1429 = vpack.c.b16 %v1411, %v1410
    %v1430 = vpack.c.b16 %v1413, %v1412
    %v1431 = vpack.c.b16 %v1415, %v1414
    %1448 = vmatprep.subr.bf16.mxu0 0
    %1449 = vmatpush1.bf16.msra.mxu0 %v1416
    %1450 = vmatprep.subr.bf16.mxu0 0
    %1451 = vmatpush1.bf16.msra.mxu0 %v1417
    %1452 = vmatprep.subr.bf16.mxu0 0
    %1453 = vmatpush1.bf16.msra.mxu0 %v1418
    %1454 = vmatprep.subr.bf16.mxu0 0
    %1455 = vmatpush1.bf16.msra.mxu0 %v1419
    %1456 = vmatprep.subr.bf16.mxu0 0
    %1457 = vmatpush1.bf16.msra.mxu0 %v1420
    %1458 = vmatprep.subr.bf16.mxu0 0
    %1459 = vmatpush1.bf16.msra.mxu0 %v1421
    %1460 = vmatprep.subr.bf16.mxu0 0
    %1461 = vmatpush1.bf16.msra.mxu0 %v1422
    %1462 = vmatprep.subr.bf16.mxu0 0
    %1463 = vmatpush1.bf16.msra.mxu0 %v1423
    %1464 = vmatprep.subr.bf16.mxu0 0
    %1465 = vmatpush1.bf16.msra.mxu0 %v1424
    %1466 = vmatprep.subr.bf16.mxu0 0
    %1467 = vmatpush1.bf16.msra.mxu0 %v1425
    %1468 = vmatprep.subr.bf16.mxu0 0
    %1469 = vmatpush1.bf16.msra.mxu0 %v1426
    %1470 = vmatprep.subr.bf16.mxu0 0
    %1471 = vmatpush1.bf16.msra.mxu0 %v1427
    %1472 = vmatprep.subr.bf16.mxu0 0
    %1473 = vmatpush1.bf16.msra.mxu0 %v1428
    %1474 = vmatprep.subr.bf16.mxu0 0
    %1475 = vmatpush1.bf16.msra.mxu0 %v1429
    %1476 = vmatprep.subr.bf16.mxu0 0
    %1477 = vmatpush1.bf16.msra.mxu0 %v1430
    %1478 = vmatprep.subr.bf16.mxu0 0
    %1479 = vmatpush1.bf16.msra.mxu0 %v1431
    %1480 = vmatprep.mubr.bf16.mxu0 %v1312
    %1481 = vmatmul.mubr.bf16.gmra.mrb[0].mxu0 %v1311
    %v1482 = vpop.f32.mrb[0].mxu0
    %v1483 = vadd.f32 %v1350, %v1482
    %v1484 = vpop.f32.mrb[0].mxu0
    %v1485 = vpop.f32.mrb[0].mxu0
    %v1486 = vadd.f32 %v1350, %v1485
    %v1487 = vpop.f32.mrb[0].mxu0
    %1488 = vdwg.mxu0
    %1489 = vst.msk [vmem:[#allocation2] sm:$0xff] %vm135, %v1483
    %1490 = vst.msk [vmem:[#allocation2 + $0x8] sm:$0xff] %vm135, %v1486
    // Predicated region
    $region30: #{multi_head_self_attention.1} parent=1 // pred_check
      _
    $region31: #{multi_head_self_attention.1} parent=1 // pred_check_branch
      %1492 = sbr.rel (0) target = $region33
    $region32: #{multi_head_self_attention.1} parent=1 // pred_region
      %s1494 = ssub.s32 256, 256
      %1495 = vsyncadd [#allocation3], %s1494
      %s1496 = sshll.u32 [#allocation2], 4
      %s1497 = int_to_ptr.vmem [resolvable:$true] %s1496
      %1502 = dma.vmem_to_hbm [thread:$0]  %s1497, 256, %s7, [#allocation3], 128, 128, 8
    $region33: #{multi_head_self_attention.1} parent=1 // pred_fallthru
      _
    // Predicated region
    $region34: #{multi_head_self_attention.1} parent=1 // pred_check
      _
    $region35: #{multi_head_self_attention.1} parent=1 // pred_check_branch
      %1504 = sbr.rel (0) target = $region37
    $region36: #{multi_head_self_attention.1} parent=1 // pred_region
      %1505 = dma.done [#allocation3], 256
    $region37: #{multi_head_self_attention.1} parent=1 // pred_fallthru
      _
    %1506 = vsyncpa [#allocation3], 1

</llo_original>
